<compile_context>
chip_gen: v7x
topology: tpu7x:2x2x1
jax: 0.10.0
libtpu: 0.0.40
codegen_flags: <defaults>
</compile_context>

<pallas_src>
import math
import functools

import jax
import jax.numpy as jnp
from jax import lax
from jax.experimental import pallas as pl
from jax.experimental.pallas import tpu as pltpu


def _layernorm(x, gamma, beta, eps=1e-5):
    mu = jnp.mean(x, axis=-1, keepdims=True)
    var = jnp.mean((x - mu) ** 2, axis=-1, keepdims=True)
    return (x - mu) * lax.rsqrt(var + eps) * gamma + beta


def _gelu_exact(x):
    # torch.nn.GELU() default = exact erf-based GELU
    return 0.5 * x * (1.0 + lax.erf(x * (1.0 / math.sqrt(2.0))))


def transformer_block_kernel(x_ref, ln1_g_ref, ln1_b_ref, wqkv_ref,
                             ln2_g_ref, ln2_b_ref, w1_ref, b1_ref,
                             w2_ref, b2_ref, o_ref, *, num_heads):
    x = x_ref[0]                                   # (S, E) f32
    S, E = x.shape
    D = E // num_heads

    # ---- LN1 + fused QKV projection (bf16 operands, f32 accumulation) ----
    h = _layernorm(x, ln1_g_ref[0], ln1_b_ref[0])                       # f32
    qkv = jnp.dot(h.astype(jnp.bfloat16), wqkv_ref[...],
                  preferred_element_type=jnp.float32)                   # (S, 3E) f32
    # Q columns of wqkv were pre-scaled by 1/sqrt(E) in the wrapper.
    q = qkv[:, 0 * E:1 * E]
    k = qkv[:, 1 * E:2 * E]
    v = qkv[:, 2 * E:3 * E]

    # ---- batched multi-head attention: head-major (H, S, D) operands ----
    def split_heads(t):
        return jnp.stack([t[:, hh * D:(hh + 1) * D] for hh in range(num_heads)],
                         axis=0)                                        # (H, S, D)

    qh = split_heads(q).astype(jnp.bfloat16)
    kh = split_heads(k).astype(jnp.bfloat16)
    vh = split_heads(v).astype(jnp.bfloat16)

    s = jnp.einsum('hqd,hkd->hqk', qh, kh,
                   preferred_element_type=jnp.float32)                  # (H, S, S) f32
    s = s - jnp.max(s, axis=-1, keepdims=True)
    p = jnp.exp(s)                                                      # f32 softmax
    p = p * pl.reciprocal(jnp.sum(p, axis=-1, keepdims=True), approx=True)
    o = jnp.einsum('hqk,hkd->hqd', p.astype(jnp.bfloat16), vh,
                   preferred_element_type=jnp.float32)                  # (H, S, D) f32
    attn = jnp.concatenate([o[hh] for hh in range(num_heads)], axis=-1)  # (S, E)

    h = attn + x                                   # residual 1

    # ---- LN2 + MLP ----
    h2 = _layernorm(h, ln2_g_ref[0], ln2_b_ref[0])
    ff = jnp.dot(h2.astype(jnp.bfloat16), w1_ref[...],
                 preferred_element_type=jnp.float32) + b1_ref[0]
    ff = _gelu_exact(ff)                                                # f32 GELU
    ff = jnp.dot(ff.astype(jnp.bfloat16), w2_ref[...],
                 preferred_element_type=jnp.float32) + b2_ref[0]

    o_ref[0] = (ff + h).astype(o_ref.dtype)        # residual 2


def transformer_block(x, params, num_heads):
    B, S, E = x.shape
    I = params["w1"].shape[1]

    # Fold the (torch-module) 1/sqrt(embed_dim) attention scale into the Q
    # third of W_qkv, then ship matmul weights as bf16 (f32 accumulation in
    # the kernel).  LN params and biases stay f32.
    inv_sqrt_dim = 1.0 / math.sqrt(E)              # NOTE: embed_dim, as in the torch module
    wqkv = params["wqkv"].astype(jnp.float32)
    wqkv = jnp.concatenate([wqkv[:, :E] * inv_sqrt_dim, wqkv[:, E:]], axis=1)
    wqkv_bf16 = wqkv.astype(jnp.bfloat16)
    w1_bf16 = params["w1"].astype(jnp.bfloat16)
    w2_bf16 = params["w2"].astype(jnp.bfloat16)

    # Explicit VMEM budget: bf16 weights (single-buffered) + f32 activations
    # (double-buffered x/out tiles + intermediates), with generous headroom.
    est_bytes = ((E * 3 * E + E * I + I * E) * 2
                 + (4 * S * E + S * 3 * E + S * I + num_heads * S * S) * 4)
    vmem_limit = int(min(64 * 2**20, max(16 * 2**20, 4 * est_bytes)))

    kernel = functools.partial(transformer_block_kernel, num_heads=num_heads)

    def _call(single_buffer_weights):
        def const(shape):
            if single_buffer_weights:
                # Grid-invariant weights/biases: no need for double buffering.
                return pl.BlockSpec(shape, lambda b: (0,) * len(shape),
                                    pipeline_mode=pl.Buffered(1))
            return pl.BlockSpec(shape, lambda b: (0,) * len(shape))

        return pl.pallas_call(
            kernel,
            out_shape=jax.ShapeDtypeStruct((B, S, E), x.dtype),
            grid_spec=pltpu.PrefetchScalarGridSpec(
                num_scalar_prefetch=0,
                grid=(B,),
                in_specs=[
                    pl.BlockSpec((1, S, E), lambda b: (b, 0, 0)),   # x
                    const((1, E)),                                  # ln1 gamma
                    const((1, E)),                                  # ln1 beta
                    const((E, 3 * E)),                              # w_qkv (bf16, Q pre-scaled)
                    const((1, E)),                                  # ln2 gamma
                    const((1, E)),                                  # ln2 beta
                    const((E, I)),                                  # fc1 weight (bf16)
                    const((1, I)),                                  # fc1 bias
                    const((I, E)),                                  # fc2 weight (bf16)
                    const((1, E)),                                  # fc2 bias
                ],
                out_specs=pl.BlockSpec((1, S, E), lambda b: (b, 0, 0)),
            ),
            compiler_params=pltpu.CompilerParams(
                dimension_semantics=("parallel",),
                vmem_limit_bytes=vmem_limit),
        )(x, params["ln1_g"], params["ln1_b"], wqkv_bf16,
          params["ln2_g"], params["ln2_b"], w1_bf16, params["b1"],
          w2_bf16, params["b2"])

    try:
        return _call(single_buffer_weights=True)
    except Exception:
        # Fallback for jax versions where pl.Buffered(1) is not accepted.
        return _call(single_buffer_weights=False)


def reference_block(x, params, num_heads):
    """Pure-JAX f32 reference (mirrors the torch forward) for self-check."""
    B, S, E = x.shape
    D = E // num_heads

    def ln(v, g, b):
        mu = jnp.mean(v, -1, keepdims=True)
        var = jnp.mean((v - mu) ** 2, -1, keepdims=True)
        return (v - mu) / jnp.sqrt(var + 1e-5) * g[0] + b[0]

    h = ln(x, params["ln1_g"], params["ln1_b"])
    qkv = h @ params["wqkv"]
    q, k, v = jnp.split(qkv, 3, axis=-1)
    sh = lambda t: t.reshape(B, S, num_heads, D).transpose(0, 2, 1, 3)
    q, k, v = sh(q), sh(k), sh(v)
    s = jnp.einsum("bhqd,bhkd->bhqk", q, k) / math.sqrt(E)
    w = jax.nn.softmax(s, axis=-1)
    o = jnp.einsum("bhqk,bhkd->bhqd", w, v).transpose(0, 2, 1, 3).reshape(B, S, E)
    h = o + x
    r = h
    h = ln(h, params["ln2_g"], params["ln2_b"])
    ff = h @ params["w1"] + params["b1"][0]
    ff = 0.5 * ff * (1.0 + lax.erf(ff / math.sqrt(2.0)))
    ff = ff @ params["w2"] + params["b2"][0]
    return ff + r


if __name__ == "__main__":
    B, S, E, H = 2, 8, 32, 4
    I = 4 * E

    key = jax.random.PRNGKey(0)
    ks = jax.random.split(key, 8)
    scale = 0.05
    params = {
        "ln1_g": jnp.ones((1, E), jnp.float32),
        "ln1_b": jnp.zeros((1, E), jnp.float32),
        "wqkv": scale * jax.random.normal(ks[0], (E, 3 * E), jnp.float32),
        "ln2_g": jnp.ones((1, E), jnp.float32),
        "ln2_b": jnp.zeros((1, E), jnp.float32),
        "w1": scale * jax.random.normal(ks[1], (E, I), jnp.float32),
        "b1": scale * jax.random.normal(ks[2], (1, I), jnp.float32),
        "w2": scale * jax.random.normal(ks[3], (I, E), jnp.float32),
        "b2": scale * jax.random.normal(ks[4], (1, E), jnp.float32),
    }
    x = jax.random.normal(ks[5], (B, S, E), jnp.float32)

    out = transformer_block(x, params, H)
    out = jax.block_until_ready(out)

    ref = reference_block(x, params, H)
    assert out.shape == (B, S, E)
    # bf16 matmul operands (f32 accumulation) -> loosened tolerance vs f32 ref.
    assert jnp.allclose(out, ref, atol=2e-2, rtol=2e-2), "mismatch vs reference"
    print("KERNEL_OK")
</pallas_src>

<mosaic_0001>
module attributes {stable_mosaic.version = 11 : i64} {
  func.func @transformer_block_kernel(%arg0: i32, %arg1: memref<1x8x32xf32, #tpu.memory_space<vmem>>, %arg2: memref<1x32xf32, #tpu.memory_space<vmem>>, %arg3: memref<1x32xf32, #tpu.memory_space<vmem>>, %arg4: memref<32x96xbf16, #tpu.memory_space<vmem>>, %arg5: memref<1x32xf32, #tpu.memory_space<vmem>>, %arg6: memref<1x32xf32, #tpu.memory_space<vmem>>, %arg7: memref<32x128xbf16, #tpu.memory_space<vmem>>, %arg8: memref<1x128xf32, #tpu.memory_space<vmem>>, %arg9: memref<128x32xbf16, #tpu.memory_space<vmem>>, %arg10: memref<1x32xf32, #tpu.memory_space<vmem>>, %arg11: memref<1x8x32xf32, #tpu.memory_space<vmem>>) attributes {dimension_semantics = [#tpu.dimension_semantics<parallel>], iteration_bounds = array<i64: 2>, scalar_prefetch = 0 : i64, scratch_operands = 0 : i64, tpu.core_type = #tpu.core_type<tc>, window_params = [{transform_indices = @transform_0, window_bounds = array<i64: 1, 8, 32>}, {pipeline_mode = #tpu.pipeline_mode<synchronous>, transform_indices = @transform_1, window_bounds = array<i64: 1, 32>}, {pipeline_mode = #tpu.pipeline_mode<synchronous>, transform_indices = @transform_2, window_bounds = array<i64: 1, 32>}, {pipeline_mode = #tpu.pipeline_mode<synchronous>, transform_indices = @transform_3, window_bounds = array<i64: 32, 96>}, {pipeline_mode = #tpu.pipeline_mode<synchronous>, transform_indices = @transform_4, window_bounds = array<i64: 1, 32>}, {pipeline_mode = #tpu.pipeline_mode<synchronous>, transform_indices = @transform_5, window_bounds = array<i64: 1, 32>}, {pipeline_mode = #tpu.pipeline_mode<synchronous>, transform_indices = @transform_6, window_bounds = array<i64: 32, 128>}, {pipeline_mode = #tpu.pipeline_mode<synchronous>, transform_indices = @transform_7, window_bounds = array<i64: 1, 128>}, {pipeline_mode = #tpu.pipeline_mode<synchronous>, transform_indices = @transform_8, window_bounds = array<i64: 128, 32>}, {pipeline_mode = #tpu.pipeline_mode<synchronous>, transform_indices = @transform_9, window_bounds = array<i64: 1, 32>}, {transform_indices = @transform_10, window_bounds = array<i64: 1, 8, 32>}]} {
    %c0 = arith.constant 0 : index
    %c0_0 = arith.constant 0 : index
    %c0_1 = arith.constant 0 : index
    %0 = vector.load %arg1[%c0, %c0_0, %c0_1] : memref<1x8x32xf32, #tpu.memory_space<vmem>>, vector<1x8x32xf32>
    %1 = vector.shape_cast %0 : vector<1x8x32xf32> to vector<8x32xf32>
    %c0_2 = arith.constant 0 : index
    %c0_3 = arith.constant 0 : index
    %2 = vector.load %arg2[%c0_2, %c0_3] : memref<1x32xf32, #tpu.memory_space<vmem>>, vector<1x32xf32>
    %3 = vector.shape_cast %2 : vector<1x32xf32> to vector<32xf32>
    %c0_4 = arith.constant 0 : index
    %c0_5 = arith.constant 0 : index
    %4 = vector.load %arg3[%c0_4, %c0_5] : memref<1x32xf32, #tpu.memory_space<vmem>>, vector<1x32xf32>
    %5 = vector.shape_cast %4 : vector<1x32xf32> to vector<32xf32>
    %cst = arith.constant dense<0.000000e+00> : vector<8xf32>
    %6 = vector.multi_reduction <add>, %1, %cst [1] : vector<8x32xf32> to vector<8xf32>
    %7 = vector.shape_cast %6 : vector<8xf32> to vector<8x1xf32>
    %cst_6 = arith.constant 3.200000e+01 : f32
    %8 = vector.broadcast %cst_6 : f32 to vector<8x1xf32>
    %9 = arith.divf %7, %8 : vector<8x1xf32>
    %10 = vector.broadcast %9 : vector<8x1xf32> to vector<8x32xf32>
    %11 = arith.subf %1, %10 : vector<8x32xf32>
    %12 = arith.mulf %11, %11 : vector<8x32xf32>
    %cst_7 = arith.constant dense<0.000000e+00> : vector<8xf32>
    %13 = vector.multi_reduction <add>, %12, %cst_7 [1] : vector<8x32xf32> to vector<8xf32>
    %14 = vector.shape_cast %13 : vector<8xf32> to vector<8x1xf32>
    %cst_8 = arith.constant 3.200000e+01 : f32
    %15 = vector.broadcast %cst_8 : f32 to vector<8x1xf32>
    %16 = arith.divf %14, %15 : vector<8x1xf32>
    %17 = vector.broadcast %9 : vector<8x1xf32> to vector<8x32xf32>
    %18 = arith.subf %1, %17 : vector<8x32xf32>
    %cst_9 = arith.constant 9.99999974E-6 : f32
    %19 = vector.broadcast %cst_9 : f32 to vector<8x1xf32>
    %20 = arith.addf %16, %19 : vector<8x1xf32>
    %21 = math.rsqrt %20 : vector<8x1xf32>
    %22 = vector.broadcast %21 : vector<8x1xf32> to vector<8x32xf32>
    %23 = arith.mulf %18, %22 : vector<8x32xf32>
    %24 = vector.shape_cast %3 : vector<32xf32> to vector<1x32xf32>
    %25 = vector.broadcast %24 : vector<1x32xf32> to vector<8x32xf32>
    %26 = arith.mulf %23, %25 : vector<8x32xf32>
    %27 = vector.shape_cast %5 : vector<32xf32> to vector<1x32xf32>
    %28 = vector.broadcast %27 : vector<1x32xf32> to vector<8x32xf32>
    %29 = arith.addf %26, %28 : vector<8x32xf32>
    %30 = arith.truncf %29 : vector<8x32xf32> to vector<8x32xbf16>
    %c0_10 = arith.constant 0 : index
    %c0_11 = arith.constant 0 : index
    %31 = vector.load %arg4[%c0_10, %c0_11] : memref<32x96xbf16, #tpu.memory_space<vmem>>, vector<32x96xbf16>
    %cst_12 = arith.constant dense<0.000000e+00> : vector<8x96xf32>
    %32 = tpu.matmul %30, %31, %cst_12 {dimension_numbers = #tpu.dot_dimension_numbers<[1], [0], [0], [1], [0, 0, 1, 1], [], []>} : vector<8x32xbf16>, vector<32x96xbf16>, vector<8x96xf32> -> vector<8x96xf32>
    %33 = vector.extract_strided_slice %32 {offsets = [0, 0], sizes = [8, 32], strides = [1, 1]} : vector<8x96xf32> to vector<8x32xf32>
    %34 = vector.extract_strided_slice %32 {offsets = [0, 32], sizes = [8, 32], strides = [1, 1]} : vector<8x96xf32> to vector<8x32xf32>
    %35 = vector.extract_strided_slice %32 {offsets = [0, 64], sizes = [8, 32], strides = [1, 1]} : vector<8x96xf32> to vector<8x32xf32>
    %36 = vector.extract_strided_slice %33 {offsets = [0, 0], sizes = [8, 8], strides = [1, 1]} : vector<8x32xf32> to vector<8x8xf32>
    %37 = vector.extract_strided_slice %33 {offsets = [0, 8], sizes = [8, 8], strides = [1, 1]} : vector<8x32xf32> to vector<8x8xf32>
    %38 = vector.extract_strided_slice %33 {offsets = [0, 16], sizes = [8, 8], strides = [1, 1]} : vector<8x32xf32> to vector<8x8xf32>
    %39 = vector.extract_strided_slice %33 {offsets = [0, 24], sizes = [8, 8], strides = [1, 1]} : vector<8x32xf32> to vector<8x8xf32>
    %40 = vector.shape_cast %36 : vector<8x8xf32> to vector<1x8x8xf32>
    %41 = vector.shape_cast %37 : vector<8x8xf32> to vector<1x8x8xf32>
    %42 = vector.shape_cast %38 : vector<8x8xf32> to vector<1x8x8xf32>
    %43 = vector.shape_cast %39 : vector<8x8xf32> to vector<1x8x8xf32>
    %44 = tpu.concatenate %40, %41, %42, %43 in 0 : vector<1x8x8xf32>, vector<1x8x8xf32>, vector<1x8x8xf32>, vector<1x8x8xf32> -> vector<4x8x8xf32>
    %45 = arith.truncf %44 : vector<4x8x8xf32> to vector<4x8x8xbf16>
    %46 = vector.extract_strided_slice %34 {offsets = [0, 0], sizes = [8, 8], strides = [1, 1]} : vector<8x32xf32> to vector<8x8xf32>
    %47 = vector.extract_strided_slice %34 {offsets = [0, 8], sizes = [8, 8], strides = [1, 1]} : vector<8x32xf32> to vector<8x8xf32>
    %48 = vector.extract_strided_slice %34 {offsets = [0, 16], sizes = [8, 8], strides = [1, 1]} : vector<8x32xf32> to vector<8x8xf32>
    %49 = vector.extract_strided_slice %34 {offsets = [0, 24], sizes = [8, 8], strides = [1, 1]} : vector<8x32xf32> to vector<8x8xf32>
    %50 = vector.shape_cast %46 : vector<8x8xf32> to vector<1x8x8xf32>
    %51 = vector.shape_cast %47 : vector<8x8xf32> to vector<1x8x8xf32>
    %52 = vector.shape_cast %48 : vector<8x8xf32> to vector<1x8x8xf32>
    %53 = vector.shape_cast %49 : vector<8x8xf32> to vector<1x8x8xf32>
    %54 = tpu.concatenate %50, %51, %52, %53 in 0 : vector<1x8x8xf32>, vector<1x8x8xf32>, vector<1x8x8xf32>, vector<1x8x8xf32> -> vector<4x8x8xf32>
    %55 = arith.truncf %54 : vector<4x8x8xf32> to vector<4x8x8xbf16>
    %56 = vector.extract_strided_slice %35 {offsets = [0, 0], sizes = [8, 8], strides = [1, 1]} : vector<8x32xf32> to vector<8x8xf32>
    %57 = vector.extract_strided_slice %35 {offsets = [0, 8], sizes = [8, 8], strides = [1, 1]} : vector<8x32xf32> to vector<8x8xf32>
    %58 = vector.extract_strided_slice %35 {offsets = [0, 16], sizes = [8, 8], strides = [1, 1]} : vector<8x32xf32> to vector<8x8xf32>
    %59 = vector.extract_strided_slice %35 {offsets = [0, 24], sizes = [8, 8], strides = [1, 1]} : vector<8x32xf32> to vector<8x8xf32>
    %60 = vector.shape_cast %56 : vector<8x8xf32> to vector<1x8x8xf32>
    %61 = vector.shape_cast %57 : vector<8x8xf32> to vector<1x8x8xf32>
    %62 = vector.shape_cast %58 : vector<8x8xf32> to vector<1x8x8xf32>
    %63 = vector.shape_cast %59 : vector<8x8xf32> to vector<1x8x8xf32>
    %64 = tpu.concatenate %60, %61, %62, %63 in 0 : vector<1x8x8xf32>, vector<1x8x8xf32>, vector<1x8x8xf32>, vector<1x8x8xf32> -> vector<4x8x8xf32>
    %65 = arith.truncf %64 : vector<4x8x8xf32> to vector<4x8x8xbf16>
    "tpu.trace_start"() <{level = 10 : i32, message = "hqd,hkd->hqk"}> : () -> ()
    %cst_13 = arith.constant dense<0.000000e+00> : vector<4x8x8xf32>
    %66 = tpu.matmul %45, %55, %cst_13 {dimension_numbers = #tpu.dot_dimension_numbers<[2], [2], [1], [1], [0, 0, 0, 1, 1, 1], [0], [0]>} : vector<4x8x8xbf16>, vector<4x8x8xbf16>, vector<4x8x8xf32> -> vector<4x8x8xf32>
    "tpu.trace_stop"() : () -> ()
    %cst_14 = arith.constant dense<0xFF800000> : vector<4x8xf32>
    %67 = vector.multi_reduction <maximumf>, %66, %cst_14 [2] : vector<4x8x8xf32> to vector<4x8xf32>
    %68 = vector.shape_cast %67 : vector<4x8xf32> to vector<4x8x1xf32>
    %69 = vector.broadcast %68 : vector<4x8x1xf32> to vector<4x8x8xf32>
    %70 = arith.subf %66, %69 : vector<4x8x8xf32>
    %71 = math.exp %70 : vector<4x8x8xf32>
    %cst_15 = arith.constant dense<0.000000e+00> : vector<4x8xf32>
    %72 = vector.multi_reduction <add>, %71, %cst_15 [2] : vector<4x8x8xf32> to vector<4x8xf32>
    %73 = vector.shape_cast %72 : vector<4x8xf32> to vector<4x8x1xf32>
    %74 = tpu.reciprocal %73 {approx = true} : vector<4x8x1xf32> -> vector<4x8x1xf32>
    %75 = vector.broadcast %74 : vector<4x8x1xf32> to vector<4x8x8xf32>
    %76 = arith.mulf %71, %75 : vector<4x8x8xf32>
    %77 = arith.truncf %76 : vector<4x8x8xf32> to vector<4x8x8xbf16>
    "tpu.trace_start"() <{level = 10 : i32, message = "hqk,hkd->hqd"}> : () -> ()
    %cst_16 = arith.constant dense<0.000000e+00> : vector<4x8x8xf32>
    %78 = tpu.matmul %77, %65, %cst_16 {dimension_numbers = #tpu.dot_dimension_numbers<[2], [1], [1], [2], [0, 0, 0, 1, 1, 2], [0], [0]>} : vector<4x8x8xbf16>, vector<4x8x8xbf16>, vector<4x8x8xf32> -> vector<4x8x8xf32>
    "tpu.trace_stop"() : () -> ()
    %79 = vector.extract_strided_slice %78 {offsets = [0, 0, 0], sizes = [1, 8, 8], strides = [1, 1, 1]} : vector<4x8x8xf32> to vector<1x8x8xf32>
    %80 = vector.shape_cast %79 : vector<1x8x8xf32> to vector<8x8xf32>
    %81 = vector.extract_strided_slice %78 {offsets = [1, 0, 0], sizes = [1, 8, 8], strides = [1, 1, 1]} : vector<4x8x8xf32> to vector<1x8x8xf32>
    %82 = vector.shape_cast %81 : vector<1x8x8xf32> to vector<8x8xf32>
    %83 = vector.extract_strided_slice %78 {offsets = [2, 0, 0], sizes = [1, 8, 8], strides = [1, 1, 1]} : vector<4x8x8xf32> to vector<1x8x8xf32>
    %84 = vector.shape_cast %83 : vector<1x8x8xf32> to vector<8x8xf32>
    %85 = vector.extract_strided_slice %78 {offsets = [3, 0, 0], sizes = [1, 8, 8], strides = [1, 1, 1]} : vector<4x8x8xf32> to vector<1x8x8xf32>
    %86 = vector.shape_cast %85 : vector<1x8x8xf32> to vector<8x8xf32>
    %87 = tpu.concatenate %80, %82, %84, %86 in 1 : vector<8x8xf32>, vector<8x8xf32>, vector<8x8xf32>, vector<8x8xf32> -> vector<8x32xf32>
    %88 = arith.addf %87, %1 : vector<8x32xf32>
    %c0_17 = arith.constant 0 : index
    %c0_18 = arith.constant 0 : index
    %89 = vector.load %arg5[%c0_17, %c0_18] : memref<1x32xf32, #tpu.memory_space<vmem>>, vector<1x32xf32>
    %90 = vector.shape_cast %89 : vector<1x32xf32> to vector<32xf32>
    %c0_19 = arith.constant 0 : index
    %c0_20 = arith.constant 0 : index
    %91 = vector.load %arg6[%c0_19, %c0_20] : memref<1x32xf32, #tpu.memory_space<vmem>>, vector<1x32xf32>
    %92 = vector.shape_cast %91 : vector<1x32xf32> to vector<32xf32>
    %cst_21 = arith.constant dense<0.000000e+00> : vector<8xf32>
    %93 = vector.multi_reduction <add>, %88, %cst_21 [1] : vector<8x32xf32> to vector<8xf32>
    %94 = vector.shape_cast %93 : vector<8xf32> to vector<8x1xf32>
    %cst_22 = arith.constant 3.200000e+01 : f32
    %95 = vector.broadcast %cst_22 : f32 to vector<8x1xf32>
    %96 = arith.divf %94, %95 : vector<8x1xf32>
    %97 = vector.broadcast %96 : vector<8x1xf32> to vector<8x32xf32>
    %98 = arith.subf %88, %97 : vector<8x32xf32>
    %99 = arith.mulf %98, %98 : vector<8x32xf32>
    %cst_23 = arith.constant dense<0.000000e+00> : vector<8xf32>
    %100 = vector.multi_reduction <add>, %99, %cst_23 [1] : vector<8x32xf32> to vector<8xf32>
    %101 = vector.shape_cast %100 : vector<8xf32> to vector<8x1xf32>
    %cst_24 = arith.constant 3.200000e+01 : f32
    %102 = vector.broadcast %cst_24 : f32 to vector<8x1xf32>
    %103 = arith.divf %101, %102 : vector<8x1xf32>
    %104 = vector.broadcast %96 : vector<8x1xf32> to vector<8x32xf32>
    %105 = arith.subf %88, %104 : vector<8x32xf32>
    %cst_25 = arith.constant 9.99999974E-6 : f32
    %106 = vector.broadcast %cst_25 : f32 to vector<8x1xf32>
    %107 = arith.addf %103, %106 : vector<8x1xf32>
    %108 = math.rsqrt %107 : vector<8x1xf32>
    %109 = vector.broadcast %108 : vector<8x1xf32> to vector<8x32xf32>
    %110 = arith.mulf %105, %109 : vector<8x32xf32>
    %111 = vector.shape_cast %90 : vector<32xf32> to vector<1x32xf32>
    %112 = vector.broadcast %111 : vector<1x32xf32> to vector<8x32xf32>
    %113 = arith.mulf %110, %112 : vector<8x32xf32>
    %114 = vector.shape_cast %92 : vector<32xf32> to vector<1x32xf32>
    %115 = vector.broadcast %114 : vector<1x32xf32> to vector<8x32xf32>
    %116 = arith.addf %113, %115 : vector<8x32xf32>
    %117 = arith.truncf %116 : vector<8x32xf32> to vector<8x32xbf16>
    %c0_26 = arith.constant 0 : index
    %c0_27 = arith.constant 0 : index
    %118 = vector.load %arg7[%c0_26, %c0_27] : memref<32x128xbf16, #tpu.memory_space<vmem>>, vector<32x128xbf16>
    %cst_28 = arith.constant dense<0.000000e+00> : vector<8x128xf32>
    %119 = tpu.matmul %117, %118, %cst_28 {dimension_numbers = #tpu.dot_dimension_numbers<[1], [0], [0], [1], [0, 0, 1, 1], [], []>} : vector<8x32xbf16>, vector<32x128xbf16>, vector<8x128xf32> -> vector<8x128xf32>
    %c0_29 = arith.constant 0 : index
    %c0_30 = arith.constant 0 : index
    %120 = vector.load %arg8[%c0_29, %c0_30] : memref<1x128xf32, #tpu.memory_space<vmem>>, vector<1x128xf32>
    %121 = vector.shape_cast %120 : vector<1x128xf32> to vector<128xf32>
    %122 = vector.shape_cast %121 : vector<128xf32> to vector<1x128xf32>
    %123 = vector.broadcast %122 : vector<1x128xf32> to vector<8x128xf32>
    %124 = arith.addf %119, %123 : vector<8x128xf32>
    %cst_31 = arith.constant 5.000000e-01 : f32
    %125 = vector.broadcast %cst_31 : f32 to vector<8x128xf32>
    %126 = arith.mulf %125, %124 : vector<8x128xf32>
    %cst_32 = arith.constant 0.707106769 : f32
    %127 = vector.broadcast %cst_32 : f32 to vector<8x128xf32>
    %128 = arith.mulf %124, %127 : vector<8x128xf32>
    %129 = math.erf %128 : vector<8x128xf32>
    %cst_33 = arith.constant 1.000000e+00 : f32
    %130 = vector.broadcast %cst_33 : f32 to vector<8x128xf32>
    %131 = arith.addf %130, %129 : vector<8x128xf32>
    %132 = arith.mulf %126, %131 : vector<8x128xf32>
    %133 = arith.truncf %132 : vector<8x128xf32> to vector<8x128xbf16>
    %c0_34 = arith.constant 0 : index
    %c0_35 = arith.constant 0 : index
    %134 = vector.load %arg9[%c0_34, %c0_35] : memref<128x32xbf16, #tpu.memory_space<vmem>>, vector<128x32xbf16>
    %cst_36 = arith.constant dense<0.000000e+00> : vector<8x32xf32>
    %135 = tpu.matmul %133, %134, %cst_36 {dimension_numbers = #tpu.dot_dimension_numbers<[1], [0], [0], [1], [0, 0, 1, 1], [], []>} : vector<8x128xbf16>, vector<128x32xbf16>, vector<8x32xf32> -> vector<8x32xf32>
    %c0_37 = arith.constant 0 : index
    %c0_38 = arith.constant 0 : index
    %136 = vector.load %arg10[%c0_37, %c0_38] : memref<1x32xf32, #tpu.memory_space<vmem>>, vector<1x32xf32>
    %137 = vector.shape_cast %136 : vector<1x32xf32> to vector<32xf32>
    %138 = vector.shape_cast %137 : vector<32xf32> to vector<1x32xf32>
    %139 = vector.broadcast %138 : vector<1x32xf32> to vector<8x32xf32>
    %140 = arith.addf %135, %139 : vector<8x32xf32>
    %141 = arith.addf %140, %88 : vector<8x32xf32>
    %c0_39 = arith.constant 0 : index
    %c0_40 = arith.constant 0 : index
    %c0_41 = arith.constant 0 : index
    %142 = vector.load %arg11[%c0_39, %c0_40, %c0_41] : memref<1x8x32xf32, #tpu.memory_space<vmem>>, vector<1x8x32xf32>
    %143 = vector.shape_cast %142 : vector<1x8x32xf32> to vector<8x32xf32>
    %144 = vector.shape_cast %141 : vector<8x32xf32> to vector<1x8x32xf32>
    tpu.vector_store %arg11[%c0_39, %c0_40, %c0_41], %144 {strides = array<i32>} : memref<1x8x32xf32, #tpu.memory_space<vmem>>, vector<1x8x32xf32>,
    return
  }
  func.func @transform_0(%arg0: i32) -> (i32, i32, i32) {
    %c0_i32 = arith.constant 0 : i32
    %c0_i32_0 = arith.constant 0 : i32
    %c0_i32_1 = arith.constant 0 : i32
    return %arg0, %c0_i32, %c0_i32_0 : i32, i32, i32
  }
  func.func @transform_1(%arg0: i32) -> (i32, i32) {
    %c0_i32 = arith.constant 0 : i32
    %c0_i32_0 = arith.constant 0 : i32
    %c0_i32_1 = arith.constant 0 : i32
    return %c0_i32, %c0_i32_0 : i32, i32
  }
  func.func @transform_2(%arg0: i32) -> (i32, i32) {
    %c0_i32 = arith.constant 0 : i32
    %c0_i32_0 = arith.constant 0 : i32
    %c0_i32_1 = arith.constant 0 : i32
    return %c0_i32, %c0_i32_0 : i32, i32
  }
  func.func @transform_3(%arg0: i32) -> (i32, i32) {
    %c0_i32 = arith.constant 0 : i32
    %c0_i32_0 = arith.constant 0 : i32
    %c0_i32_1 = arith.constant 0 : i32
    return %c0_i32, %c0_i32_0 : i32, i32
  }
  func.func @transform_4(%arg0: i32) -> (i32, i32) {
    %c0_i32 = arith.constant 0 : i32
    %c0_i32_0 = arith.constant 0 : i32
    %c0_i32_1 = arith.constant 0 : i32
    return %c0_i32, %c0_i32_0 : i32, i32
  }
  func.func @transform_5(%arg0: i32) -> (i32, i32) {
    %c0_i32 = arith.constant 0 : i32
    %c0_i32_0 = arith.constant 0 : i32
    %c0_i32_1 = arith.constant 0 : i32
    return %c0_i32, %c0_i32_0 : i32, i32
  }
  func.func @transform_6(%arg0: i32) -> (i32, i32) {
    %c0_i32 = arith.constant 0 : i32
    %c0_i32_0 = arith.constant 0 : i32
    %c0_i32_1 = arith.constant 0 : i32
    return %c0_i32, %c0_i32_0 : i32, i32
  }
  func.func @transform_7(%arg0: i32) -> (i32, i32) {
    %c0_i32 = arith.constant 0 : i32
    %c0_i32_0 = arith.constant 0 : i32
    %c0_i32_1 = arith.constant 0 : i32
    return %c0_i32, %c0_i32_0 : i32, i32
  }
  func.func @transform_8(%arg0: i32) -> (i32, i32) {
    %c0_i32 = arith.constant 0 : i32
    %c0_i32_0 = arith.constant 0 : i32
    %c0_i32_1 = arith.constant 0 : i32
    return %c0_i32, %c0_i32_0 : i32, i32
  }
  func.func @transform_9(%arg0: i32) -> (i32, i32) {
    %c0_i32 = arith.constant 0 : i32
    %c0_i32_0 = arith.constant 0 : i32
    %c0_i32_1 = arith.constant 0 : i32
    return %c0_i32, %c0_i32_0 : i32, i32
  }
  func.func @transform_10(%arg0: i32) -> (i32, i32, i32) {
    %c0_i32 = arith.constant 0 : i32
    %c0_i32_0 = arith.constant 0 : i32
    %c0_i32_1 = arith.constant 0 : i32
    return %arg0, %c0_i32, %c0_i32_0 : i32, i32, i32
  }
}

module attributes {stable_mosaic.version = 11 : i64} {
  func.func @transformer_block_kernel(%arg0: i32, %arg1: memref<1x8x32xf32, #tpu.memory_space<vmem>>, %arg2: memref<1x32xf32, #tpu.memory_space<vmem>>, %arg3: memref<1x32xf32, #tpu.memory_space<vmem>>, %arg4: memref<32x96xbf16, #tpu.memory_space<vmem>>, %arg5: memref<1x32xf32, #tpu.memory_space<vmem>>, %arg6: memref<1x32xf32, #tpu.memory_space<vmem>>, %arg7: memref<32x128xbf16, #tpu.memory_space<vmem>>, %arg8: memref<1x128xf32, #tpu.memory_space<vmem>>, %arg9: memref<128x32xbf16, #tpu.memory_space<vmem>>, %arg10: memref<1x32xf32, #tpu.memory_space<vmem>>, %arg11: memref<1x8x32xf32, #tpu.memory_space<vmem>>) attributes {dimension_semantics = [#tpu.dimension_semantics<parallel>], iteration_bounds = array<i64: 2>, scalar_prefetch = 0 : i64, scratch_operands = 0 : i64, tpu.core_type = #tpu.core_type<tc>, window_params = [{transform_indices = @transform_0, window_bounds = array<i64: 1, 8, 32>}, {pipeline_mode = #tpu.pipeline_mode<synchronous>, transform_indices = @transform_1, window_bounds = array<i64: 1, 32>}, {pipeline_mode = #tpu.pipeline_mode<synchronous>, transform_indices = @transform_2, window_bounds = array<i64: 1, 32>}, {pipeline_mode = #tpu.pipeline_mode<synchronous>, transform_indices = @transform_3, window_bounds = array<i64: 32, 96>}, {pipeline_mode = #tpu.pipeline_mode<synchronous>, transform_indices = @transform_4, window_bounds = array<i64: 1, 32>}, {pipeline_mode = #tpu.pipeline_mode<synchronous>, transform_indices = @transform_5, window_bounds = array<i64: 1, 32>}, {pipeline_mode = #tpu.pipeline_mode<synchronous>, transform_indices = @transform_6, window_bounds = array<i64: 32, 128>}, {pipeline_mode = #tpu.pipeline_mode<synchronous>, transform_indices = @transform_7, window_bounds = array<i64: 1, 128>}, {pipeline_mode = #tpu.pipeline_mode<synchronous>, transform_indices = @transform_8, window_bounds = array<i64: 128, 32>}, {pipeline_mode = #tpu.pipeline_mode<synchronous>, transform_indices = @transform_9, window_bounds = array<i64: 1, 32>}, {transform_indices = @transform_10, window_bounds = array<i64: 1, 8, 32>}]} {
    %c0 = arith.constant 0 : index
    %c0_0 = arith.constant 0 : index
    %c0_1 = arith.constant 0 : index
    %0 = vector.load %arg1[%c0, %c0_0, %c0_1] : memref<1x8x32xf32, #tpu.memory_space<vmem>>, vector<1x8x32xf32>
    %1 = vector.shape_cast %0 : vector<1x8x32xf32> to vector<8x32xf32>
    %c0_2 = arith.constant 0 : index
    %c0_3 = arith.constant 0 : index
    %2 = vector.load %arg2[%c0_2, %c0_3] : memref<1x32xf32, #tpu.memory_space<vmem>>, vector<1x32xf32>
    %3 = vector.shape_cast %2 : vector<1x32xf32> to vector<32xf32>
    %c0_4 = arith.constant 0 : index
    %c0_5 = arith.constant 0 : index
    %4 = vector.load %arg3[%c0_4, %c0_5] : memref<1x32xf32, #tpu.memory_space<vmem>>, vector<1x32xf32>
    %5 = vector.shape_cast %4 : vector<1x32xf32> to vector<32xf32>
    %cst = arith.constant dense<0.000000e+00> : vector<8xf32>
    %6 = vector.multi_reduction <add>, %1, %cst [1] : vector<8x32xf32> to vector<8xf32>
    %7 = vector.shape_cast %6 : vector<8xf32> to vector<8x1xf32>
    %cst_6 = arith.constant 3.200000e+01 : f32
    %8 = vector.broadcast %cst_6 : f32 to vector<8x1xf32>
    %9 = arith.divf %7, %8 : vector<8x1xf32>
    %10 = vector.broadcast %9 : vector<8x1xf32> to vector<8x32xf32>
    %11 = arith.subf %1, %10 : vector<8x32xf32>
    %12 = arith.mulf %11, %11 : vector<8x32xf32>
    %cst_7 = arith.constant dense<0.000000e+00> : vector<8xf32>
    %13 = vector.multi_reduction <add>, %12, %cst_7 [1] : vector<8x32xf32> to vector<8xf32>
    %14 = vector.shape_cast %13 : vector<8xf32> to vector<8x1xf32>
    %cst_8 = arith.constant 3.200000e+01 : f32
    %15 = vector.broadcast %cst_8 : f32 to vector<8x1xf32>
    %16 = arith.divf %14, %15 : vector<8x1xf32>
    %17 = vector.broadcast %9 : vector<8x1xf32> to vector<8x32xf32>
    %18 = arith.subf %1, %17 : vector<8x32xf32>
    %cst_9 = arith.constant 9.99999974E-6 : f32
    %19 = vector.broadcast %cst_9 : f32 to vector<8x1xf32>
    %20 = arith.addf %16, %19 : vector<8x1xf32>
    %21 = math.rsqrt %20 : vector<8x1xf32>
    %22 = vector.broadcast %21 : vector<8x1xf32> to vector<8x32xf32>
    %23 = arith.mulf %18, %22 : vector<8x32xf32>
    %24 = vector.shape_cast %3 : vector<32xf32> to vector<1x32xf32>
    %25 = vector.broadcast %24 : vector<1x32xf32> to vector<8x32xf32>
    %26 = arith.mulf %23, %25 : vector<8x32xf32>
    %27 = vector.shape_cast %5 : vector<32xf32> to vector<1x32xf32>
    %28 = vector.broadcast %27 : vector<1x32xf32> to vector<8x32xf32>
    %29 = arith.addf %26, %28 : vector<8x32xf32>
    %30 = arith.truncf %29 : vector<8x32xf32> to vector<8x32xbf16>
    %c0_10 = arith.constant 0 : index
    %c0_11 = arith.constant 0 : index
    %31 = vector.load %arg4[%c0_10, %c0_11] : memref<32x96xbf16, #tpu.memory_space<vmem>>, vector<32x96xbf16>
    %cst_12 = arith.constant dense<0.000000e+00> : vector<8x96xf32>
    %32 = tpu.matmul %30, %31, %cst_12 {dimension_numbers = #tpu.dot_dimension_numbers<[1], [0], [0], [1], [0, 0, 1, 1], [], []>} : vector<8x32xbf16>, vector<32x96xbf16>, vector<8x96xf32> -> vector<8x96xf32>
    %33 = vector.extract_strided_slice %32 {offsets = [0, 0], sizes = [8, 32], strides = [1, 1]} : vector<8x96xf32> to vector<8x32xf32>
    %34 = vector.extract_strided_slice %32 {offsets = [0, 32], sizes = [8, 32], strides = [1, 1]} : vector<8x96xf32> to vector<8x32xf32>
    %35 = vector.extract_strided_slice %32 {offsets = [0, 64], sizes = [8, 32], strides = [1, 1]} : vector<8x96xf32> to vector<8x32xf32>
    %36 = vector.extract_strided_slice %33 {offsets = [0, 0], sizes = [8, 8], strides = [1, 1]} : vector<8x32xf32> to vector<8x8xf32>
    %37 = vector.extract_strided_slice %33 {offsets = [0, 8], sizes = [8, 8], strides = [1, 1]} : vector<8x32xf32> to vector<8x8xf32>
    %38 = vector.extract_strided_slice %33 {offsets = [0, 16], sizes = [8, 8], strides = [1, 1]} : vector<8x32xf32> to vector<8x8xf32>
    %39 = vector.extract_strided_slice %33 {offsets = [0, 24], sizes = [8, 8], strides = [1, 1]} : vector<8x32xf32> to vector<8x8xf32>
    %40 = vector.shape_cast %36 : vector<8x8xf32> to vector<1x8x8xf32>
    %41 = vector.shape_cast %37 : vector<8x8xf32> to vector<1x8x8xf32>
    %42 = vector.shape_cast %38 : vector<8x8xf32> to vector<1x8x8xf32>
    %43 = vector.shape_cast %39 : vector<8x8xf32> to vector<1x8x8xf32>
    %44 = tpu.concatenate %40, %41, %42, %43 in 0 : vector<1x8x8xf32>, vector<1x8x8xf32>, vector<1x8x8xf32>, vector<1x8x8xf32> -> vector<4x8x8xf32>
    %45 = arith.truncf %44 : vector<4x8x8xf32> to vector<4x8x8xbf16>
    %46 = vector.extract_strided_slice %34 {offsets = [0, 0], sizes = [8, 8], strides = [1, 1]} : vector<8x32xf32> to vector<8x8xf32>
    %47 = vector.extract_strided_slice %34 {offsets = [0, 8], sizes = [8, 8], strides = [1, 1]} : vector<8x32xf32> to vector<8x8xf32>
    %48 = vector.extract_strided_slice %34 {offsets = [0, 16], sizes = [8, 8], strides = [1, 1]} : vector<8x32xf32> to vector<8x8xf32>
    %49 = vector.extract_strided_slice %34 {offsets = [0, 24], sizes = [8, 8], strides = [1, 1]} : vector<8x32xf32> to vector<8x8xf32>
    %50 = vector.shape_cast %46 : vector<8x8xf32> to vector<1x8x8xf32>
    %51 = vector.shape_cast %47 : vector<8x8xf32> to vector<1x8x8xf32>
    %52 = vector.shape_cast %48 : vector<8x8xf32> to vector<1x8x8xf32>
    %53 = vector.shape_cast %49 : vector<8x8xf32> to vector<1x8x8xf32>
    %54 = tpu.concatenate %50, %51, %52, %53 in 0 : vector<1x8x8xf32>, vector<1x8x8xf32>, vector<1x8x8xf32>, vector<1x8x8xf32> -> vector<4x8x8xf32>
    %55 = arith.truncf %54 : vector<4x8x8xf32> to vector<4x8x8xbf16>
    %56 = vector.extract_strided_slice %35 {offsets = [0, 0], sizes = [8, 8], strides = [1, 1]} : vector<8x32xf32> to vector<8x8xf32>
    %57 = vector.extract_strided_slice %35 {offsets = [0, 8], sizes = [8, 8], strides = [1, 1]} : vector<8x32xf32> to vector<8x8xf32>
    %58 = vector.extract_strided_slice %35 {offsets = [0, 16], sizes = [8, 8], strides = [1, 1]} : vector<8x32xf32> to vector<8x8xf32>
    %59 = vector.extract_strided_slice %35 {offsets = [0, 24], sizes = [8, 8], strides = [1, 1]} : vector<8x32xf32> to vector<8x8xf32>
    %60 = vector.shape_cast %56 : vector<8x8xf32> to vector<1x8x8xf32>
    %61 = vector.shape_cast %57 : vector<8x8xf32> to vector<1x8x8xf32>
    %62 = vector.shape_cast %58 : vector<8x8xf32> to vector<1x8x8xf32>
    %63 = vector.shape_cast %59 : vector<8x8xf32> to vector<1x8x8xf32>
    %64 = tpu.concatenate %60, %61, %62, %63 in 0 : vector<1x8x8xf32>, vector<1x8x8xf32>, vector<1x8x8xf32>, vector<1x8x8xf32> -> vector<4x8x8xf32>
    %65 = arith.truncf %64 : vector<4x8x8xf32> to vector<4x8x8xbf16>
    "tpu.trace_start"() <{level = 10 : i32, message = "hqd,hkd->hqk"}> : () -> ()
    %cst_13 = arith.constant dense<0.000000e+00> : vector<4x8x8xf32>
    %66 = tpu.matmul %45, %55, %cst_13 {dimension_numbers = #tpu.dot_dimension_numbers<[2], [2], [1], [1], [0, 0, 0, 1, 1, 1], [0], [0]>} : vector<4x8x8xbf16>, vector<4x8x8xbf16>, vector<4x8x8xf32> -> vector<4x8x8xf32>
    "tpu.trace_stop"() : () -> ()
    %cst_14 = arith.constant dense<0xFF800000> : vector<4x8xf32>
    %67 = vector.multi_reduction <maximumf>, %66, %cst_14 [2] : vector<4x8x8xf32> to vector<4x8xf32>
    %68 = vector.shape_cast %67 : vector<4x8xf32> to vector<4x8x1xf32>
    %69 = vector.broadcast %68 : vector<4x8x1xf32> to vector<4x8x8xf32>
    %70 = arith.subf %66, %69 : vector<4x8x8xf32>
    %71 = math.exp %70 : vector<4x8x8xf32>
    %cst_15 = arith.constant dense<0.000000e+00> : vector<4x8xf32>
    %72 = vector.multi_reduction <add>, %71, %cst_15 [2] : vector<4x8x8xf32> to vector<4x8xf32>
    %73 = vector.shape_cast %72 : vector<4x8xf32> to vector<4x8x1xf32>
    %74 = tpu.reciprocal %73 {approx = true} : vector<4x8x1xf32> -> vector<4x8x1xf32>
    %75 = vector.broadcast %74 : vector<4x8x1xf32> to vector<4x8x8xf32>
    %76 = arith.mulf %71, %75 : vector<4x8x8xf32>
    %77 = arith.truncf %76 : vector<4x8x8xf32> to vector<4x8x8xbf16>
    "tpu.trace_start"() <{level = 10 : i32, message = "hqk,hkd->hqd"}> : () -> ()
    %cst_16 = arith.constant dense<0.000000e+00> : vector<4x8x8xf32>
    %78 = tpu.matmul %77, %65, %cst_16 {dimension_numbers = #tpu.dot_dimension_numbers<[2], [1], [1], [2], [0, 0, 0, 1, 1, 2], [0], [0]>} : vector<4x8x8xbf16>, vector<4x8x8xbf16>, vector<4x8x8xf32> -> vector<4x8x8xf32>
    "tpu.trace_stop"() : () -> ()
    %79 = vector.extract_strided_slice %78 {offsets = [0, 0, 0], sizes = [1, 8, 8], strides = [1, 1, 1]} : vector<4x8x8xf32> to vector<1x8x8xf32>
    %80 = vector.shape_cast %79 : vector<1x8x8xf32> to vector<8x8xf32>
    %81 = vector.extract_strided_slice %78 {offsets = [1, 0, 0], sizes = [1, 8, 8], strides = [1, 1, 1]} : vector<4x8x8xf32> to vector<1x8x8xf32>
    %82 = vector.shape_cast %81 : vector<1x8x8xf32> to vector<8x8xf32>
    %83 = vector.extract_strided_slice %78 {offsets = [2, 0, 0], sizes = [1, 8, 8], strides = [1, 1, 1]} : vector<4x8x8xf32> to vector<1x8x8xf32>
    %84 = vector.shape_cast %83 : vector<1x8x8xf32> to vector<8x8xf32>
    %85 = vector.extract_strided_slice %78 {offsets = [3, 0, 0], sizes = [1, 8, 8], strides = [1, 1, 1]} : vector<4x8x8xf32> to vector<1x8x8xf32>
    %86 = vector.shape_cast %85 : vector<1x8x8xf32> to vector<8x8xf32>
    %87 = tpu.concatenate %80, %82, %84, %86 in 1 : vector<8x8xf32>, vector<8x8xf32>, vector<8x8xf32>, vector<8x8xf32> -> vector<8x32xf32>
    %88 = arith.addf %87, %1 : vector<8x32xf32>
    %c0_17 = arith.constant 0 : index
    %c0_18 = arith.constant 0 : index
    %89 = vector.load %arg5[%c0_17, %c0_18] : memref<1x32xf32, #tpu.memory_space<vmem>>, vector<1x32xf32>
    %90 = vector.shape_cast %89 : vector<1x32xf32> to vector<32xf32>
    %c0_19 = arith.constant 0 : index
    %c0_20 = arith.constant 0 : index
    %91 = vector.load %arg6[%c0_19, %c0_20] : memref<1x32xf32, #tpu.memory_space<vmem>>, vector<1x32xf32>
    %92 = vector.shape_cast %91 : vector<1x32xf32> to vector<32xf32>
    %cst_21 = arith.constant dense<0.000000e+00> : vector<8xf32>
    %93 = vector.multi_reduction <add>, %88, %cst_21 [1] : vector<8x32xf32> to vector<8xf32>
    %94 = vector.shape_cast %93 : vector<8xf32> to vector<8x1xf32>
    %cst_22 = arith.constant 3.200000e+01 : f32
    %95 = vector.broadcast %cst_22 : f32 to vector<8x1xf32>
    %96 = arith.divf %94, %95 : vector<8x1xf32>
    %97 = vector.broadcast %96 : vector<8x1xf32> to vector<8x32xf32>
    %98 = arith.subf %88, %97 : vector<8x32xf32>
    %99 = arith.mulf %98, %98 : vector<8x32xf32>
    %cst_23 = arith.constant dense<0.000000e+00> : vector<8xf32>
    %100 = vector.multi_reduction <add>, %99, %cst_23 [1] : vector<8x32xf32> to vector<8xf32>
    %101 = vector.shape_cast %100 : vector<8xf32> to vector<8x1xf32>
    %cst_24 = arith.constant 3.200000e+01 : f32
    %102 = vector.broadcast %cst_24 : f32 to vector<8x1xf32>
    %103 = arith.divf %101, %102 : vector<8x1xf32>
    %104 = vector.broadcast %96 : vector<8x1xf32> to vector<8x32xf32>
    %105 = arith.subf %88, %104 : vector<8x32xf32>
    %cst_25 = arith.constant 9.99999974E-6 : f32
    %106 = vector.broadcast %cst_25 : f32 to vector<8x1xf32>
    %107 = arith.addf %103, %106 : vector<8x1xf32>
    %108 = math.rsqrt %107 : vector<8x1xf32>
    %109 = vector.broadcast %108 : vector<8x1xf32> to vector<8x32xf32>
    %110 = arith.mulf %105, %109 : vector<8x32xf32>
    %111 = vector.shape_cast %90 : vector<32xf32> to vector<1x32xf32>
    %112 = vector.broadcast %111 : vector<1x32xf32> to vector<8x32xf32>
    %113 = arith.mulf %110, %112 : vector<8x32xf32>
    %114 = vector.shape_cast %92 : vector<32xf32> to vector<1x32xf32>
    %115 = vector.broadcast %114 : vector<1x32xf32> to vector<8x32xf32>
    %116 = arith.addf %113, %115 : vector<8x32xf32>
    %117 = arith.truncf %116 : vector<8x32xf32> to vector<8x32xbf16>
    %c0_26 = arith.constant 0 : index
    %c0_27 = arith.constant 0 : index
    %118 = vector.load %arg7[%c0_26, %c0_27] : memref<32x128xbf16, #tpu.memory_space<vmem>>, vector<32x128xbf16>
    %cst_28 = arith.constant dense<0.000000e+00> : vector<8x128xf32>
    %119 = tpu.matmul %117, %118, %cst_28 {dimension_numbers = #tpu.dot_dimension_numbers<[1], [0], [0], [1], [0, 0, 1, 1], [], []>} : vector<8x32xbf16>, vector<32x128xbf16>, vector<8x128xf32> -> vector<8x128xf32>
    %c0_29 = arith.constant 0 : index
    %c0_30 = arith.constant 0 : index
    %120 = vector.load %arg8[%c0_29, %c0_30] : memref<1x128xf32, #tpu.memory_space<vmem>>, vector<1x128xf32>
    %121 = vector.shape_cast %120 : vector<1x128xf32> to vector<128xf32>
    %122 = vector.shape_cast %121 : vector<128xf32> to vector<1x128xf32>
    %123 = vector.broadcast %122 : vector<1x128xf32> to vector<8x128xf32>
    %124 = arith.addf %119, %123 : vector<8x128xf32>
    %cst_31 = arith.constant 5.000000e-01 : f32
    %125 = vector.broadcast %cst_31 : f32 to vector<8x128xf32>
    %126 = arith.mulf %125, %124 : vector<8x128xf32>
    %cst_32 = arith.constant 0.707106769 : f32
    %127 = vector.broadcast %cst_32 : f32 to vector<8x128xf32>
    %128 = arith.mulf %124, %127 : vector<8x128xf32>
    %129 = math.erf %128 : vector<8x128xf32>
    %cst_33 = arith.constant 1.000000e+00 : f32
    %130 = vector.broadcast %cst_33 : f32 to vector<8x128xf32>
    %131 = arith.addf %130, %129 : vector<8x128xf32>
    %132 = arith.mulf %126, %131 : vector<8x128xf32>
    %133 = arith.truncf %132 : vector<8x128xf32> to vector<8x128xbf16>
    %c0_34 = arith.constant 0 : index
    %c0_35 = arith.constant 0 : index
    %134 = vector.load %arg9[%c0_34, %c0_35] : memref<128x32xbf16, #tpu.memory_space<vmem>>, vector<128x32xbf16>
    %cst_36 = arith.constant dense<0.000000e+00> : vector<8x32xf32>
    %135 = tpu.matmul %133, %134, %cst_36 {dimension_numbers = #tpu.dot_dimension_numbers<[1], [0], [0], [1], [0, 0, 1, 1], [], []>} : vector<8x128xbf16>, vector<128x32xbf16>, vector<8x32xf32> -> vector<8x32xf32>
    %c0_37 = arith.constant 0 : index
    %c0_38 = arith.constant 0 : index
    %136 = vector.load %arg10[%c0_37, %c0_38] : memref<1x32xf32, #tpu.memory_space<vmem>>, vector<1x32xf32>
    %137 = vector.shape_cast %136 : vector<1x32xf32> to vector<32xf32>
    %138 = vector.shape_cast %137 : vector<32xf32> to vector<1x32xf32>
    %139 = vector.broadcast %138 : vector<1x32xf32> to vector<8x32xf32>
    %140 = arith.addf %135, %139 : vector<8x32xf32>
    %141 = arith.addf %140, %88 : vector<8x32xf32>
    %c0_39 = arith.constant 0 : index
    %c0_40 = arith.constant 0 : index
    %c0_41 = arith.constant 0 : index
    %142 = vector.load %arg11[%c0_39, %c0_40, %c0_41] : memref<1x8x32xf32, #tpu.memory_space<vmem>>, vector<1x8x32xf32>
    %143 = vector.shape_cast %142 : vector<1x8x32xf32> to vector<8x32xf32>
    %144 = vector.shape_cast %141 : vector<8x32xf32> to vector<1x8x32xf32>
    tpu.vector_store %arg11[%c0_39, %c0_40, %c0_41], %144 {strides = array<i32>} : memref<1x8x32xf32, #tpu.memory_space<vmem>>, vector<1x8x32xf32>,
    return
  }
  func.func @transform_0(%arg0: i32) -> (i32, i32, i32) {
    %c0_i32 = arith.constant 0 : i32
    %c0_i32_0 = arith.constant 0 : i32
    %c0_i32_1 = arith.constant 0 : i32
    return %arg0, %c0_i32, %c0_i32_0 : i32, i32, i32
  }
  func.func @transform_1(%arg0: i32) -> (i32, i32) {
    %c0_i32 = arith.constant 0 : i32
    %c0_i32_0 = arith.constant 0 : i32
    %c0_i32_1 = arith.constant 0 : i32
    return %c0_i32, %c0_i32_0 : i32, i32
  }
  func.func @transform_2(%arg0: i32) -> (i32, i32) {
    %c0_i32 = arith.constant 0 : i32
    %c0_i32_0 = arith.constant 0 : i32
    %c0_i32_1 = arith.constant 0 : i32
    return %c0_i32, %c0_i32_0 : i32, i32
  }
  func.func @transform_3(%arg0: i32) -> (i32, i32) {
    %c0_i32 = arith.constant 0 : i32
    %c0_i32_0 = arith.constant 0 : i32
    %c0_i32_1 = arith.constant 0 : i32
    return %c0_i32, %c0_i32_0 : i32, i32
  }
  func.func @transform_4(%arg0: i32) -> (i32, i32) {
    %c0_i32 = arith.constant 0 : i32
    %c0_i32_0 = arith.constant 0 : i32
    %c0_i32_1 = arith.constant 0 : i32
    return %c0_i32, %c0_i32_0 : i32, i32
  }
  func.func @transform_5(%arg0: i32) -> (i32, i32) {
    %c0_i32 = arith.constant 0 : i32
    %c0_i32_0 = arith.constant 0 : i32
    %c0_i32_1 = arith.constant 0 : i32
    return %c0_i32, %c0_i32_0 : i32, i32
  }
  func.func @transform_6(%arg0: i32) -> (i32, i32) {
    %c0_i32 = arith.constant 0 : i32
    %c0_i32_0 = arith.constant 0 : i32
    %c0_i32_1 = arith.constant 0 : i32
    return %c0_i32, %c0_i32_0 : i32, i32
  }
  func.func @transform_7(%arg0: i32) -> (i32, i32) {
    %c0_i32 = arith.constant 0 : i32
    %c0_i32_0 = arith.constant 0 : i32
    %c0_i32_1 = arith.constant 0 : i32
    return %c0_i32, %c0_i32_0 : i32, i32
  }
  func.func @transform_8(%arg0: i32) -> (i32, i32) {
    %c0_i32 = arith.constant 0 : i32
    %c0_i32_0 = arith.constant 0 : i32
    %c0_i32_1 = arith.constant 0 : i32
    return %c0_i32, %c0_i32_0 : i32, i32
  }
  func.func @transform_9(%arg0: i32) -> (i32, i32) {
    %c0_i32 = arith.constant 0 : i32
    %c0_i32_0 = arith.constant 0 : i32
    %c0_i32_1 = arith.constant 0 : i32
    return %c0_i32, %c0_i32_0 : i32, i32
  }
  func.func @transform_10(%arg0: i32) -> (i32, i32, i32) {
    %c0_i32 = arith.constant 0 : i32
    %c0_i32_0 = arith.constant 0 : i32
    %c0_i32_1 = arith.constant 0 : i32
    return %arg0, %c0_i32, %c0_i32_0 : i32, i32, i32
  }
}

</mosaic_0001>

<llo_original>
// kernel: tpu_custom_call.1
$region0: #{tpu_custom_call.1}
  #allocation0 [shape = 'u32[]', space=smem, size = 0x4, offset = 0x4, fixed_abs, tag = 'smem constant byte address 0x4 - core index']
  #allocation1 [shape = 'u32[144,128]{1,0:T(1,128)}', space=vmem, size = 0x12000, scoped, tag = 'internal scratch']
  %s0 = inlined_call_operand.vmem [shape: f32[2,8,32], index: 0, kind: input, shape index: {}]
  %s1 = inlined_call_operand.vmem [shape: f32[1,32], index: 1, kind: input, shape index: {}]
  %s2 = inlined_call_operand.vmem [shape: f32[1,32], index: 2, kind: input, shape index: {}]
  %s3 = inlined_call_operand.vmem [shape: bf16[32,96], index: 3, kind: input, shape index: {}]
  %s4 = inlined_call_operand.vmem [shape: f32[1,32], index: 4, kind: input, shape index: {}]
  %s5 = inlined_call_operand.vmem [shape: f32[1,32], index: 5, kind: input, shape index: {}]
  %s6 = inlined_call_operand.vmem [shape: bf16[32,128], index: 6, kind: input, shape index: {}]
  %s7 = inlined_call_operand.vmem [shape: f32[1,128], index: 7, kind: input, shape index: {}]
  %s8 = inlined_call_operand.vmem [shape: bf16[128,32], index: 8, kind: input, shape index: {}]
  %s9 = inlined_call_operand.vmem [shape: f32[1,32], index: 9, kind: input, shape index: {}]
  %s10 = inlined_call_operand.hbm [shape: f32[2,8,32], index: 10, kind: output, shape index: {}]
  %s11 = sld [smem:[#allocation0]]
  $region73: #{tpu_custom_call.1} parent=0
    _
  %s13 = ssub.s32 1, %s11
  %s14 = scalar_select 0, %s13, %s11
  $region1: #{tpu_custom_call.1} parent=0
    #allocation2 [shape = 'u8[8192]{0}', space=vmem, size = 0x2000, scoped, tag = 'output window, operand 0']
    #allocation3 [shape = 's32[2]{0}', space=sflag, size = 0x8, scoped, tag = 'scoped memory for tpu_custom_call.1']
    %15 = vsyncpa [#allocation3], 0
    %s16 = scalar_lea.sflag [#allocation3], 1
    %17 = vsyncpa %s16, 0
    loop: start=0, step=1, limit=4
    $region2: #{tpu_custom_call.1} parent=1 // loop_pre_header
      _
    $region3: #{tpu_custom_call.1} parent=1 // loop_header
      %s19 = sphi 0, %s23
      %p20 = scmp.ge.s32.totalorder %s19, 4
      %s29 = sphi 0, %s31
      %s32 = sphi 0, %s29
      %s33 = sphi 0, %s32
      %s49 = sphi 0, %s33
      %s53 = sphi 0, %s53
      %s55 = sphi 0, %s53
      %s56 = sphi 0, %s55
      %s70 = sphi 0, %s56
      %s74 = sphi 0, %s74
      %s76 = sphi 0, %s74
      %s77 = sphi 0, %s76
      %s91 = sphi 0, %s77
      %s95 = sphi 0, %s95
      %s97 = sphi 0, %s95
      %s98 = sphi 0, %s97
      %s112 = sphi 0, %s98
      %s116 = sphi 0, %s116
      %s118 = sphi 0, %s116
      %s119 = sphi 0, %s118
      %s133 = sphi 0, %s119
      %s137 = sphi 0, %s137
      %s139 = sphi 0, %s137
      %s140 = sphi 0, %s139
      %s154 = sphi 0, %s140
      %s158 = sphi 0, %s158
      %s160 = sphi 0, %s158
      %s161 = sphi 0, %s160
      %s175 = sphi 0, %s161
      %s179 = sphi 0, %s179
      %s181 = sphi 0, %s179
      %s182 = sphi 0, %s181
      %s196 = sphi 0, %s182
      %s200 = sphi 0, %s200
      %s202 = sphi 0, %s200
      %s203 = sphi 0, %s202
      %s217 = sphi 0, %s203
      %s221 = sphi 0, %s221
      %s223 = sphi 0, %s221
      %s224 = sphi 0, %s223
      %s238 = sphi 0, %s224
      %s244 = sphi 0, %s246
      %s247 = sphi 0, %s244
      %s248 = sphi 0, %s247
      %s264 = sphi 0, %s248
    $region4: #{tpu_custom_call.1} parent=1 // loop_header_branch
      %22 = sbr.rel (%p20) target = $region8
    $region5: #{tpu_custom_call.1} parent=1 // loop_body
      %s24 = ssub.s32 %s19, 1
      %s25 = ssub.s32 %s19, 2
      %s26 = sadd.s32 %s19, 1
      %s27 = ssub.s32 %s19, %s26
      %p28 = scmp.eq.s32.totalorder %s27, 0
      %s30 = sadd.s32 %s29, 1
      %s31 = scalar_select %p28, %s29, %s30
      %p34 = pneg %p28
      %p35 = scmp.eq.s32.totalorder %s19, 1
      %p36 = por %p34, %p35
      %p37 = scmp.ne.s32.totalorder %s29, %s32
      %p38 = scmp.eq.s32.totalorder %s19, 0
      %p39 = por %p37, %p38
      %p40 = scmp.ne.s32.totalorder %s29, %s32
      %p41 = scmp.eq.s32.totalorder %s24, 1
      %p42 = por %p40, %p41
      %p43 = scmp.ne.s32.totalorder %s32, %s33
      %p44 = scmp.eq.s32.totalorder %s24, 0
      %p45 = por %p43, %p44
      %p46 = scmp.ne.s32.totalorder %s32, %s33
      %p47 = scmp.eq.s32.totalorder %s25, 1
      %p48 = por %p46, %p47
      %p50 = scmp.ne.s32.totalorder %s33, %s49
      %p51 = scmp.eq.s32.totalorder %s25, 0
      %p52 = por %p50, %p51
      %s54 = sadd.s32 %s53, 1
      %p57 = scmp.eq.s32.totalorder %s19, 1
      %p58 = scmp.ne.s32.totalorder %s53, %s55
      %p59 = scmp.eq.s32.totalorder %s19, 0
      %p60 = por %p58, %p59
      %p61 = scmp.ne.s32.totalorder %s53, %s55
      %p62 = scmp.eq.s32.totalorder %s24, 1
      %p63 = por %p61, %p62
      %p64 = scmp.ne.s32.totalorder %s55, %s56
      %p65 = scmp.eq.s32.totalorder %s24, 0
      %p66 = por %p64, %p65
      %p67 = scmp.ne.s32.totalorder %s55, %s56
      %p68 = scmp.eq.s32.totalorder %s25, 1
      %p69 = por %p67, %p68
      %p71 = scmp.ne.s32.totalorder %s56, %s70
      %p72 = scmp.eq.s32.totalorder %s25, 0
      %p73 = por %p71, %p72
      %s75 = sadd.s32 %s74, 1
      %p78 = scmp.eq.s32.totalorder %s19, 1
      %p79 = scmp.ne.s32.totalorder %s74, %s76
      %p80 = scmp.eq.s32.totalorder %s19, 0
      %p81 = por %p79, %p80
      %p82 = scmp.ne.s32.totalorder %s74, %s76
      %p83 = scmp.eq.s32.totalorder %s24, 1
      %p84 = por %p82, %p83
      %p85 = scmp.ne.s32.totalorder %s76, %s77
      %p86 = scmp.eq.s32.totalorder %s24, 0
      %p87 = por %p85, %p86
      %p88 = scmp.ne.s32.totalorder %s76, %s77
      %p89 = scmp.eq.s32.totalorder %s25, 1
      %p90 = por %p88, %p89
      %p92 = scmp.ne.s32.totalorder %s77, %s91
      %p93 = scmp.eq.s32.totalorder %s25, 0
      %p94 = por %p92, %p93
      %s96 = sadd.s32 %s95, 1
      %p99 = scmp.eq.s32.totalorder %s19, 1
      %p100 = scmp.ne.s32.totalorder %s95, %s97
      %p101 = scmp.eq.s32.totalorder %s19, 0
      %p102 = por %p100, %p101
      %p103 = scmp.ne.s32.totalorder %s95, %s97
      %p104 = scmp.eq.s32.totalorder %s24, 1
      %p105 = por %p103, %p104
      %p106 = scmp.ne.s32.totalorder %s97, %s98
      %p107 = scmp.eq.s32.totalorder %s24, 0
      %p108 = por %p106, %p107
      %p109 = scmp.ne.s32.totalorder %s97, %s98
      %p110 = scmp.eq.s32.totalorder %s25, 1
      %p111 = por %p109, %p110
      %p113 = scmp.ne.s32.totalorder %s98, %s112
      %p114 = scmp.eq.s32.totalorder %s25, 0
      %p115 = por %p113, %p114
      %s117 = sadd.s32 %s116, 1
      %p120 = scmp.eq.s32.totalorder %s19, 1
      %p121 = scmp.ne.s32.totalorder %s116, %s118
      %p122 = scmp.eq.s32.totalorder %s19, 0
      %p123 = por %p121, %p122
      %p124 = scmp.ne.s32.totalorder %s116, %s118
      %p125 = scmp.eq.s32.totalorder %s24, 1
      %p126 = por %p124, %p125
      %p127 = scmp.ne.s32.totalorder %s118, %s119
      %p128 = scmp.eq.s32.totalorder %s24, 0
      %p129 = por %p127, %p128
      %p130 = scmp.ne.s32.totalorder %s118, %s119
      %p131 = scmp.eq.s32.totalorder %s25, 1
      %p132 = por %p130, %p131
      %p134 = scmp.ne.s32.totalorder %s119, %s133
      %p135 = scmp.eq.s32.totalorder %s25, 0
      %p136 = por %p134, %p135
      %s138 = sadd.s32 %s137, 1
      %p141 = scmp.eq.s32.totalorder %s19, 1
      %p142 = scmp.ne.s32.totalorder %s137, %s139
      %p143 = scmp.eq.s32.totalorder %s19, 0
      %p144 = por %p142, %p143
      %p145 = scmp.ne.s32.totalorder %s137, %s139
      %p146 = scmp.eq.s32.totalorder %s24, 1
      %p147 = por %p145, %p146
      %p148 = scmp.ne.s32.totalorder %s139, %s140
      %p149 = scmp.eq.s32.totalorder %s24, 0
      %p150 = por %p148, %p149
      %p151 = scmp.ne.s32.totalorder %s139, %s140
      %p152 = scmp.eq.s32.totalorder %s25, 1
      %p153 = por %p151, %p152
      %p155 = scmp.ne.s32.totalorder %s140, %s154
      %p156 = scmp.eq.s32.totalorder %s25, 0
      %p157 = por %p155, %p156
      %s159 = sadd.s32 %s158, 1
      %p162 = scmp.eq.s32.totalorder %s19, 1
      %p163 = scmp.ne.s32.totalorder %s158, %s160
      %p164 = scmp.eq.s32.totalorder %s19, 0
      %p165 = por %p163, %p164
      %p166 = scmp.ne.s32.totalorder %s158, %s160
      %p167 = scmp.eq.s32.totalorder %s24, 1
      %p168 = por %p166, %p167
      %p169 = scmp.ne.s32.totalorder %s160, %s161
      %p170 = scmp.eq.s32.totalorder %s24, 0
      %p171 = por %p169, %p170
      %p172 = scmp.ne.s32.totalorder %s160, %s161
      %p173 = scmp.eq.s32.totalorder %s25, 1
      %p174 = por %p172, %p173
      %p176 = scmp.ne.s32.totalorder %s161, %s175
      %p177 = scmp.eq.s32.totalorder %s25, 0
      %p178 = por %p176, %p177
      %s180 = sadd.s32 %s179, 1
      %p183 = scmp.eq.s32.totalorder %s19, 1
      %p184 = scmp.ne.s32.totalorder %s179, %s181
      %p185 = scmp.eq.s32.totalorder %s19, 0
      %p186 = por %p184, %p185
      %p187 = scmp.ne.s32.totalorder %s179, %s181
      %p188 = scmp.eq.s32.totalorder %s24, 1
      %p189 = por %p187, %p188
      %p190 = scmp.ne.s32.totalorder %s181, %s182
      %p191 = scmp.eq.s32.totalorder %s24, 0
      %p192 = por %p190, %p191
      %p193 = scmp.ne.s32.totalorder %s181, %s182
      %p194 = scmp.eq.s32.totalorder %s25, 1
      %p195 = por %p193, %p194
      %p197 = scmp.ne.s32.totalorder %s182, %s196
      %p198 = scmp.eq.s32.totalorder %s25, 0
      %p199 = por %p197, %p198
      %s201 = sadd.s32 %s200, 1
      %p204 = scmp.eq.s32.totalorder %s19, 1
      %p205 = scmp.ne.s32.totalorder %s200, %s202
      %p206 = scmp.eq.s32.totalorder %s19, 0
      %p207 = por %p205, %p206
      %p208 = scmp.ne.s32.totalorder %s200, %s202
      %p209 = scmp.eq.s32.totalorder %s24, 1
      %p210 = por %p208, %p209
      %p211 = scmp.ne.s32.totalorder %s202, %s203
      %p212 = scmp.eq.s32.totalorder %s24, 0
      %p213 = por %p211, %p212
      %p214 = scmp.ne.s32.totalorder %s202, %s203
      %p215 = scmp.eq.s32.totalorder %s25, 1
      %p216 = por %p214, %p215
      %p218 = scmp.ne.s32.totalorder %s203, %s217
      %p219 = scmp.eq.s32.totalorder %s25, 0
      %p220 = por %p218, %p219
      %s222 = sadd.s32 %s221, 1
      %p225 = scmp.eq.s32.totalorder %s19, 1
      %p226 = scmp.ne.s32.totalorder %s221, %s223
      %p227 = scmp.eq.s32.totalorder %s19, 0
      %p228 = por %p226, %p227
      %p229 = scmp.ne.s32.totalorder %s221, %s223
      %p230 = scmp.eq.s32.totalorder %s24, 1
      %p231 = por %p229, %p230
      %p232 = scmp.ne.s32.totalorder %s223, %s224
      %p233 = scmp.eq.s32.totalorder %s24, 0
      %p234 = por %p232, %p233
      %p235 = scmp.ne.s32.totalorder %s223, %s224
      %p236 = scmp.eq.s32.totalorder %s25, 1
      %p237 = por %p235, %p236
      %p239 = scmp.ne.s32.totalorder %s224, %s238
      %p240 = scmp.eq.s32.totalorder %s25, 0
      %p241 = por %p239, %p240
      %s242 = ssub.s32 %s19, %s26
      %p243 = scmp.eq.s32.totalorder %s242, 0
      %s245 = sadd.s32 %s244, 1
      %s246 = scalar_select %p243, %s244, %s245
      %p249 = pneg %p243
      %p250 = scmp.eq.s32.totalorder %s19, 1
      %p251 = por %p249, %p250
      %p252 = scmp.ne.s32.totalorder %s244, %s247
      %p253 = scmp.eq.s32.totalorder %s19, 0
      %p254 = por %p252, %p253
      %p255 = scmp.ne.s32.totalorder %s244, %s247
      %p256 = scmp.eq.s32.totalorder %s24, 1
      %p257 = por %p255, %p256
      %p258 = scmp.ne.s32.totalorder %s247, %s248
      %p259 = scmp.eq.s32.totalorder %s24, 0
      %p260 = por %p258, %p259
      %p261 = scmp.ne.s32.totalorder %s247, %s248
      %p262 = scmp.eq.s32.totalorder %s25, 1
      %p263 = por %p261, %p262
      %p265 = scmp.ne.s32.totalorder %s248, %s264
      %p266 = scmp.eq.s32.totalorder %s25, 0
      %p267 = por %p265, %p266
      %p268 = scmp.le.s32.totalorder 1, %s19
      %p269 = scmp.lt.s32.totalorder %s19, 3
      %p270 = pnand %p268, %p269
      %p271 = pneg %p270
      // Predicated region
      $region9: #{tpu_custom_call.1} parent=5 // pred_check
        _
      $region10: #{tpu_custom_call.1} parent=5 // pred_check_branch
        %273 = sbr.rel (%p270) target = $region12
      $region11: #{tpu_custom_call.1} parent=5 // pred_region
        %s274 = ssub.s32 %s19, 1
        // Predicated region
        $region13: #{tpu_custom_call.1} parent=11 // pred_check
          %p275 = pneg %p66
        $region14: #{tpu_custom_call.1} parent=11 // pred_check_branch
          %277 = sbr.rel (%p275) target = $region16
        $region15: #{tpu_custom_call.1} parent=11 // pred_region
          _
        $region16: #{tpu_custom_call.1} parent=11 // pred_fallthru
          _
        // Predicated region
        $region17: #{tpu_custom_call.1} parent=11 // pred_check
          %p278 = pneg %p87
        $region18: #{tpu_custom_call.1} parent=11 // pred_check_branch
          %280 = sbr.rel (%p278) target = $region20
        $region19: #{tpu_custom_call.1} parent=11 // pred_region
          _
        $region20: #{tpu_custom_call.1} parent=11 // pred_fallthru
          _
        // Predicated region
        $region21: #{tpu_custom_call.1} parent=11 // pred_check
          %p281 = pneg %p108
        $region22: #{tpu_custom_call.1} parent=11 // pred_check_branch
          %283 = sbr.rel (%p281) target = $region24
        $region23: #{tpu_custom_call.1} parent=11 // pred_region
          _
        $region24: #{tpu_custom_call.1} parent=11 // pred_fallthru
          _
        // Predicated region
        $region25: #{tpu_custom_call.1} parent=11 // pred_check
          %p284 = pneg %p129
        $region26: #{tpu_custom_call.1} parent=11 // pred_check_branch
          %286 = sbr.rel (%p284) target = $region28
        $region27: #{tpu_custom_call.1} parent=11 // pred_region
          _
        $region28: #{tpu_custom_call.1} parent=11 // pred_fallthru
          _
        // Predicated region
        $region29: #{tpu_custom_call.1} parent=11 // pred_check
          %p287 = pneg %p150
        $region30: #{tpu_custom_call.1} parent=11 // pred_check_branch
          %289 = sbr.rel (%p287) target = $region32
        $region31: #{tpu_custom_call.1} parent=11 // pred_region
          _
        $region32: #{tpu_custom_call.1} parent=11 // pred_fallthru
          _
        // Predicated region
        $region33: #{tpu_custom_call.1} parent=11 // pred_check
          %p290 = pneg %p171
        $region34: #{tpu_custom_call.1} parent=11 // pred_check_branch
          %292 = sbr.rel (%p290) target = $region36
        $region35: #{tpu_custom_call.1} parent=11 // pred_region
          _
        $region36: #{tpu_custom_call.1} parent=11 // pred_fallthru
          _
        // Predicated region
        $region37: #{tpu_custom_call.1} parent=11 // pred_check
          %p293 = pneg %p192
        $region38: #{tpu_custom_call.1} parent=11 // pred_check_branch
          %295 = sbr.rel (%p293) target = $region40
        $region39: #{tpu_custom_call.1} parent=11 // pred_region
          _
        $region40: #{tpu_custom_call.1} parent=11 // pred_fallthru
          _
        // Predicated region
        $region41: #{tpu_custom_call.1} parent=11 // pred_check
          %p296 = pneg %p213
        $region42: #{tpu_custom_call.1} parent=11 // pred_check_branch
          %298 = sbr.rel (%p296) target = $region44
        $region43: #{tpu_custom_call.1} parent=11 // pred_region
          _
        $region44: #{tpu_custom_call.1} parent=11 // pred_fallthru
          _
        // Predicated region
        $region45: #{tpu_custom_call.1} parent=11 // pred_check
          %p299 = pneg %p234
        $region46: #{tpu_custom_call.1} parent=11 // pred_check_branch
          %301 = sbr.rel (%p299) target = $region48
        $region47: #{tpu_custom_call.1} parent=11 // pred_region
          _
        $region48: #{tpu_custom_call.1} parent=11 // pred_fallthru
          _
      $region12: #{tpu_custom_call.1} parent=5 // pred_fallthru
        _
      %p302 = scmp.lt.s32.totalorder %s19, 2
      // Predicated region
      $region49: #{tpu_custom_call.1} parent=5 // pred_check
        %p303 = pneg %p302
      $region50: #{tpu_custom_call.1} parent=5 // pred_check_branch
        %305 = sbr.rel (%p303) target = $region52
      $region51: #{tpu_custom_call.1} parent=5 // pred_region
        // Predicated region
        $region53: #{tpu_custom_call.1} parent=51 // pred_check
          %p306 = pneg %p39
        $region54: #{tpu_custom_call.1} parent=51 // pred_check_branch
          %308 = sbr.rel (%p306) target = $region56
        $region55: #{tpu_custom_call.1} parent=51 // pred_region
          %p309 = scmp.lt.s32.totalorder %s19, 1
          %s310 = scalar_select %p309, %s19, 1
          %s311 = smul.addr %s310, 8
          %s312 = scalar_lea.vmem %s0, %s311
        $region56: #{tpu_custom_call.1} parent=51 // pred_fallthru
          _
      $region52: #{tpu_custom_call.1} parent=5 // pred_fallthru
        _
      %p313 = scmp.le.s32.totalorder 1, %s19
      %p314 = scmp.lt.s32.totalorder %s19, 3
      %p315 = pnand %p313, %p314
      %p316 = pneg %p315
      // Predicated region
      $region57: #{tpu_custom_call.1} parent=5 // pred_check
        _
      $region58: #{tpu_custom_call.1} parent=5 // pred_check_branch
        %318 = sbr.rel (%p315) target = $region60
      $region59: #{tpu_custom_call.1} parent=5 // pred_region
        %s319 = ssub.s32 %s19, 1
        %p320 = scmp.lt.s32.totalorder %s24, 1
        %s321 = scalar_select %p320, %s24, 1
        %s322 = smul.addr %s321, 8
        %s323 = scalar_lea.vmem %s0, %s322
        %p324 = pneg %p45
        %p325 = pneg %p42
        %p326 = pneg %p66
        %p327 = pneg %p63
        %p328 = pneg %p87
        %p329 = pneg %p84
        %p330 = pneg %p108
        %p331 = pneg %p105
        %p332 = pneg %p129
        %p333 = pneg %p126
        %p334 = pneg %p150
        %p335 = pneg %p147
        %p336 = pneg %p171
        %p337 = pneg %p168
        %p338 = pneg %p192
        %p339 = pneg %p189
        %p340 = pneg %p213
        %p341 = pneg %p210
        %p342 = pneg %p234
        %p343 = pneg %p231
        %p344 = pneg %p260
        %p345 = pneg %p257
        %s346 = sand.u32 %s247, 1
        %s347 = scalar_lea.sflag [#allocation3], %s346
        %s348 = sand.u32 %s247, 1
        %s349 = smul.addr %s348, 8
        %s350 = scalar_lea.vmem [#allocation2], %s349
        %p351 = scmp.lt.s32.totalorder %s24, 1
        %s352 = scalar_select %p351, %s24, 1
        %s353 = smul.addr %s352, 8
        %s354 = scalar_lea.vmem %s0, %s353
        %v356 = vld [vmem:[%s354] sm:$0xff]
        %v357 = vld [vmem:[%s1] sm:$0x1]
        %v358 = vld [vmem:[%s2] sm:$0x1]
        %vm359 = vcmask 261120
        %v360 = vsel %vm359, %v356, 0.0
        %361 = vadd.xlane.f32.xlu0 %v360
        %v362 = vpop.xlane.xlu0 %361
        %v363 = vrcp.pop 32.0
        %v364 = vmul.f32 %v362, %v363
        %v365 = vsub.f32 %v356, %v364
        %v366 = vmul.f32 %v365, %v365
        %v367 = vsel %vm359, %v366, 0.0
        %368 = vadd.xlane.f32.xlu0 %v367
        %v369 = vpop.xlane.xlu0 %368
        %v370 = vmul.f32 %v369, %v363
        %v371 = vadd.f32 %v370, 1e-05
        %v372 = vrsqrt.pop %v371
        %v373 = vmul.f32 %v365, %v372
        %v375 = vlaneseq
        %v376 = vshrl.u32 %v375, 7
        %v377 = vsub.s32 0, %v376
        %v378 = vrot.slane %v357, %v377
        %v380 = vmul.f32 %v373, %v378
        %v382 = vlaneseq
        %v383 = vshrl.u32 %v382, 7
        %v384 = vsub.s32 0, %v383
        %v385 = vrot.slane %v358, %v384
        %v387 = vadd.f32 %v380, %v385
        %v388 = vpack.c.bf16 %v387, %v387
        %v389 = vld [vmem:[%s3] sm:$0xf]
        %v390 = vld [vmem:[%s3 + $0x4] sm:$0xf]
        %v391 = vld [vmem:[%s3 + $0x8] sm:$0xf]
        %v392 = vld [vmem:[%s3 + $0xc] sm:$0xf]
        %v397 = vunpack.c.l.b16 %v389
        %v398 = vunpack.c.l.b16 %v390
        %v399 = vunpack.c.l.b16 %v391
        %v400 = vunpack.c.l.b16 %v392
        %v401 = vpack.c.b16 %v398, %v397
        %v402 = vpack.c.b16 %v400, %v399
        %v406 = vsel %vm359, %v388, 0
        %408 = vmatprep.subr.bf16.mxu0 0
        %409 = vmatpush1.bf16.msra.mxu0 %v401
        %410 = vmatprep.subr.bf16.mxu0 0
        %411 = vmatpush1.bf16.msra.mxu0 %v402
        %412 = vmatprep.subr.bf16.mxu0 0
        %413 = vmatpush1.bf16.msra.mxu0 0
        %414 = vmatprep.subr.bf16.mxu0 0
        %415 = vmatpush1.bf16.msra.mxu0 0
        %416 = vmatprep.subr.bf16.mxu0 0
        %417 = vmatpush1.bf16.msra.mxu0 0
        %418 = vmatprep.subr.bf16.mxu0 0
        %419 = vmatpush1.bf16.msra.mxu0 0
        %420 = vmatprep.subr.bf16.mxu0 0
        %421 = vmatpush1.bf16.msra.mxu0 0
        %422 = vmatprep.subr.bf16.mxu0 0
        %423 = vmatpush1.bf16.msra.mxu0 0
        %424 = vmatprep.subr.bf16.mxu0 0
        %425 = vmatpush1.bf16.msra.mxu0 0
        %426 = vmatprep.subr.bf16.mxu0 0
        %427 = vmatpush1.bf16.msra.mxu0 0
        %428 = vmatprep.subr.bf16.mxu0 0
        %429 = vmatpush1.bf16.msra.mxu0 0
        %430 = vmatprep.subr.bf16.mxu0 0
        %431 = vmatpush1.bf16.msra.mxu0 0
        %432 = vmatprep.subr.bf16.mxu0 0
        %433 = vmatpush1.bf16.msra.mxu0 0
        %434 = vmatprep.subr.bf16.mxu0 0
        %435 = vmatpush1.bf16.msra.mxu0 0
        %436 = vmatprep.subr.bf16.mxu0 0
        %437 = vmatpush1.bf16.msra.mxu0 0
        %438 = vmatprep.subr.bf16.mxu0 0
        %439 = vmatpush1.bf16.msra.mxu0 0
        %440 = vmatprep.mubr.bf16.mxu0 0
        %441 = vmatmul.mubr.bf16.gmra.mrb[0].mxu0 %v406
        %v442 = vpop.f32.mrb[0].mxu0
        %v443 = vadd.f32 0.0, %v442
        %v444 = vpop.f32.mrb[0].mxu0
        %v445 = vpop.f32.mrb[0].mxu0
        %v446 = vpop.f32.mrb[0].mxu0
        %447 = vdwg.mxu0
        %449 = vrot.lane.b32.xlu0 %v443, 120
        %v450 = vpop.permute.xlu0 %449
        %452 = vrot.lane.b32.xlu0 %v443, 112
        %v453 = vpop.permute.xlu0 %452
        %455 = vrot.lane.b32.xlu0 %v443, 104
        %v456 = vpop.permute.xlu0 %455
        %v458 = vpack.c.bf16 %v443, %v443
        %v459 = vpack.c.bf16 %v450, %v450
        %v460 = vpack.c.bf16 %v453, %v453
        %v461 = vpack.c.bf16 %v456, %v456
        %463 = vrot.lane.b32.xlu0 %v458, 96
        %v464 = vpop.permute.xlu0 %463
        %vm465 = vcmask 64512
        %v467 = vsel %vm465, %v458, 0
        %v470 = vsel %vm465, %v464, 0
        %472 = vmatprep.subr.bf16.mxu0 0
        %473 = vmatpush1.bf16.xpose.msra.mxu0 %v470
        %474 = vmatprep.subr.bf16.mxu0 0
        %475 = vmatpush1.bf16.xpose.msra.mxu0 0
        %476 = vmatprep.subr.bf16.mxu0 0
        %477 = vmatpush1.bf16.xpose.msra.mxu0 0
        %478 = vmatprep.subr.bf16.mxu0 0
        %479 = vmatpush1.bf16.xpose.msra.mxu0 0
        %480 = vmatprep.subr.bf16.mxu0 0
        %481 = vmatpush1.bf16.xpose.msra.mxu0 0
        %482 = vmatprep.subr.bf16.mxu0 0
        %483 = vmatpush1.bf16.xpose.msra.mxu0 0
        %484 = vmatprep.subr.bf16.mxu0 0
        %485 = vmatpush1.bf16.xpose.msra.mxu0 0
        %486 = vmatprep.subr.bf16.mxu0 0
        %487 = vmatpush1.bf16.xpose.msra.mxu0 0
        %488 = vmatprep.subr.bf16.mxu0 0
        %489 = vmatpush1.bf16.xpose.msra.mxu0 0
        %490 = vmatprep.subr.bf16.mxu0 0
        %491 = vmatpush1.bf16.xpose.msra.mxu0 0
        %492 = vmatprep.subr.bf16.mxu0 0
        %493 = vmatpush1.bf16.xpose.msra.mxu0 0
        %494 = vmatprep.subr.bf16.mxu0 0
        %495 = vmatpush1.bf16.xpose.msra.mxu0 0
        %496 = vmatprep.subr.bf16.mxu0 0
        %497 = vmatpush1.bf16.xpose.msra.mxu0 0
        %498 = vmatprep.subr.bf16.mxu0 0
        %499 = vmatpush1.bf16.xpose.msra.mxu0 0
        %500 = vmatprep.subr.bf16.mxu0 0
        %501 = vmatpush1.bf16.xpose.msra.mxu0 0
        %502 = vmatprep.subr.bf16.mxu0 0
        %503 = vmatpush1.bf16.xpose.msra.mxu0 0
        %504 = vmatprep.mubr.bf16.mxu0 0
        %505 = vmatmul.mubr.bf16.gmra.mrb[0].mxu0 %v467
        %v506 = vpop.f32.mrb[0].mxu0
        %v507 = vadd.f32 0.0, %v506
        %v508 = vpop.f32.mrb[0].mxu0
        %v509 = vpop.f32.mrb[0].mxu0
        %v510 = vpop.f32.mrb[0].mxu0
        %511 = vdwg.mxu0
        %513 = vrot.lane.b32.xlu0 %v459, 96
        %v514 = vpop.permute.xlu0 %513
        %v516 = vsel %vm465, %v459, 0
        %v519 = vsel %vm465, %v514, 0
        %521 = vmatprep.subr.bf16.mxu0 0
        %522 = vmatpush1.bf16.xpose.msra.mxu0 %v519
        %523 = vmatprep.subr.bf16.mxu0 0
        %524 = vmatpush1.bf16.xpose.msra.mxu0 0
        %525 = vmatprep.subr.bf16.mxu0 0
        %526 = vmatpush1.bf16.xpose.msra.mxu0 0
        %527 = vmatprep.subr.bf16.mxu0 0
        %528 = vmatpush1.bf16.xpose.msra.mxu0 0
        %529 = vmatprep.subr.bf16.mxu0 0
        %530 = vmatpush1.bf16.xpose.msra.mxu0 0
        %531 = vmatprep.subr.bf16.mxu0 0
        %532 = vmatpush1.bf16.xpose.msra.mxu0 0
        %533 = vmatprep.subr.bf16.mxu0 0
        %534 = vmatpush1.bf16.xpose.msra.mxu0 0
        %535 = vmatprep.subr.bf16.mxu0 0
        %536 = vmatpush1.bf16.xpose.msra.mxu0 0
        %537 = vmatprep.subr.bf16.mxu0 0
        %538 = vmatpush1.bf16.xpose.msra.mxu0 0
        %539 = vmatprep.subr.bf16.mxu0 0
        %540 = vmatpush1.bf16.xpose.msra.mxu0 0
        %541 = vmatprep.subr.bf16.mxu0 0
        %542 = vmatpush1.bf16.xpose.msra.mxu0 0
        %543 = vmatprep.subr.bf16.mxu0 0
        %544 = vmatpush1.bf16.xpose.msra.mxu0 0
        %545 = vmatprep.subr.bf16.mxu0 0
        %546 = vmatpush1.bf16.xpose.msra.mxu0 0
        %547 = vmatprep.subr.bf16.mxu0 0
        %548 = vmatpush1.bf16.xpose.msra.mxu0 0
        %549 = vmatprep.subr.bf16.mxu0 0
        %550 = vmatpush1.bf16.xpose.msra.mxu0 0
        %551 = vmatprep.subr.bf16.mxu0 0
        %552 = vmatpush1.bf16.xpose.msra.mxu0 0
        %553 = vmatprep.mubr.bf16.mxu0 0
        %554 = vmatmul.mubr.bf16.gmra.mrb[0].mxu0 %v516
        %v555 = vpop.f32.mrb[0].mxu0
        %v556 = vadd.f32 0.0, %v555
        %v557 = vpop.f32.mrb[0].mxu0
        %v558 = vpop.f32.mrb[0].mxu0
        %v559 = vpop.f32.mrb[0].mxu0
        %560 = vdwg.mxu0
        %562 = vrot.lane.b32.xlu0 %v460, 96
        %v563 = vpop.permute.xlu0 %562
        %v565 = vsel %vm465, %v460, 0
        %v568 = vsel %vm465, %v563, 0
        %570 = vmatprep.subr.bf16.mxu0 0
        %571 = vmatpush1.bf16.xpose.msra.mxu0 %v568
        %572 = vmatprep.subr.bf16.mxu0 0
        %573 = vmatpush1.bf16.xpose.msra.mxu0 0
        %574 = vmatprep.subr.bf16.mxu0 0
        %575 = vmatpush1.bf16.xpose.msra.mxu0 0
        %576 = vmatprep.subr.bf16.mxu0 0
        %577 = vmatpush1.bf16.xpose.msra.mxu0 0
        %578 = vmatprep.subr.bf16.mxu0 0
        %579 = vmatpush1.bf16.xpose.msra.mxu0 0
        %580 = vmatprep.subr.bf16.mxu0 0
        %581 = vmatpush1.bf16.xpose.msra.mxu0 0
        %582 = vmatprep.subr.bf16.mxu0 0
        %583 = vmatpush1.bf16.xpose.msra.mxu0 0
        %584 = vmatprep.subr.bf16.mxu0 0
        %585 = vmatpush1.bf16.xpose.msra.mxu0 0
        %586 = vmatprep.subr.bf16.mxu0 0
        %587 = vmatpush1.bf16.xpose.msra.mxu0 0
        %588 = vmatprep.subr.bf16.mxu0 0
        %589 = vmatpush1.bf16.xpose.msra.mxu0 0
        %590 = vmatprep.subr.bf16.mxu0 0
        %591 = vmatpush1.bf16.xpose.msra.mxu0 0
        %592 = vmatprep.subr.bf16.mxu0 0
        %593 = vmatpush1.bf16.xpose.msra.mxu0 0
        %594 = vmatprep.subr.bf16.mxu0 0
        %595 = vmatpush1.bf16.xpose.msra.mxu0 0
        %596 = vmatprep.subr.bf16.mxu0 0
        %597 = vmatpush1.bf16.xpose.msra.mxu0 0
        %598 = vmatprep.subr.bf16.mxu0 0
        %599 = vmatpush1.bf16.xpose.msra.mxu0 0
        %600 = vmatprep.subr.bf16.mxu0 0
        %601 = vmatpush1.bf16.xpose.msra.mxu0 0
        %602 = vmatprep.mubr.bf16.mxu0 0
        %603 = vmatmul.mubr.bf16.gmra.mrb[0].mxu0 %v565
        %v604 = vpop.f32.mrb[0].mxu0
        %v605 = vadd.f32 0.0, %v604
        %v606 = vpop.f32.mrb[0].mxu0
        %v607 = vpop.f32.mrb[0].mxu0
        %v608 = vpop.f32.mrb[0].mxu0
        %609 = vdwg.mxu0
        %611 = vrot.lane.b32.xlu0 %v461, 96
        %v612 = vpop.permute.xlu0 %611
        %v614 = vsel %vm465, %v461, 0
        %v617 = vsel %vm465, %v612, 0
        %619 = vmatprep.subr.bf16.mxu0 0
        %620 = vmatpush1.bf16.xpose.msra.mxu0 %v617
        %621 = vmatprep.subr.bf16.mxu0 0
        %622 = vmatpush1.bf16.xpose.msra.mxu0 0
        %623 = vmatprep.subr.bf16.mxu0 0
        %624 = vmatpush1.bf16.xpose.msra.mxu0 0
        %625 = vmatprep.subr.bf16.mxu0 0
        %626 = vmatpush1.bf16.xpose.msra.mxu0 0
        %627 = vmatprep.subr.bf16.mxu0 0
        %628 = vmatpush1.bf16.xpose.msra.mxu0 0
        %629 = vmatprep.subr.bf16.mxu0 0
        %630 = vmatpush1.bf16.xpose.msra.mxu0 0
        %631 = vmatprep.subr.bf16.mxu0 0
        %632 = vmatpush1.bf16.xpose.msra.mxu0 0
        %633 = vmatprep.subr.bf16.mxu0 0
        %634 = vmatpush1.bf16.xpose.msra.mxu0 0
        %635 = vmatprep.subr.bf16.mxu0 0
        %636 = vmatpush1.bf16.xpose.msra.mxu0 0
        %637 = vmatprep.subr.bf16.mxu0 0
        %638 = vmatpush1.bf16.xpose.msra.mxu0 0
        %639 = vmatprep.subr.bf16.mxu0 0
        %640 = vmatpush1.bf16.xpose.msra.mxu0 0
        %641 = vmatprep.subr.bf16.mxu0 0
        %642 = vmatpush1.bf16.xpose.msra.mxu0 0
        %643 = vmatprep.subr.bf16.mxu0 0
        %644 = vmatpush1.bf16.xpose.msra.mxu0 0
        %645 = vmatprep.subr.bf16.mxu0 0
        %646 = vmatpush1.bf16.xpose.msra.mxu0 0
        %647 = vmatprep.subr.bf16.mxu0 0
        %648 = vmatpush1.bf16.xpose.msra.mxu0 0
        %649 = vmatprep.subr.bf16.mxu0 0
        %650 = vmatpush1.bf16.xpose.msra.mxu0 0
        %651 = vmatprep.mubr.bf16.mxu0 0
        %652 = vmatmul.mubr.bf16.gmra.mrb[0].mxu0 %v614
        %v653 = vpop.f32.mrb[0].mxu0
        %v654 = vadd.f32 0.0, %v653
        %v655 = vpop.f32.mrb[0].mxu0
        %v656 = vpop.f32.mrb[0].mxu0
        %v657 = vpop.f32.mrb[0].mxu0
        %658 = vdwg.mxu0
        %v659 = vsel %vm465, %v507, -inf
        %660 = vmax.xlane.f32.xlu0 %v659
        %v661 = vpop.xlane.xlu0 %660
        %v662 = vsel %vm465, %v556, -inf
        %663 = vmax.xlane.f32.xlu0 %v662
        %v664 = vpop.xlane.xlu0 %663
        %v665 = vsel %vm465, %v605, -inf
        %666 = vmax.xlane.f32.xlu0 %v665
        %v667 = vpop.xlane.xlu0 %666
        %v668 = vsel %vm465, %v654, -inf
        %669 = vmax.xlane.f32.xlu0 %v668
        %v670 = vpop.xlane.xlu0 %669
        %v671 = vsub.f32 %v507, %v661
        %v672 = vsub.f32 %v556, %v664
        %v673 = vsub.f32 %v605, %v667
        %v674 = vsub.f32 %v654, %v670
        %v675 = vmul.f32 %v671, 1.442695
        %v676 = vpow.pop %v675
        %v677 = vmul.f32 %v672, 1.442695
        %v678 = vpow.pop %v677
        %v679 = vmul.f32 %v673, 1.442695
        %v680 = vpow.pop %v679
        %v681 = vmul.f32 %v674, 1.442695
        %v682 = vpow.pop %v681
        %v683 = vsel %vm465, %v676, 0.0
        %684 = vadd.xlane.f32.xlu0 %v683
        %v685 = vpop.xlane.xlu0 %684
        %v686 = vsel %vm465, %v678, 0.0
        %687 = vadd.xlane.f32.xlu0 %v686
        %v688 = vpop.xlane.xlu0 %687
        %v689 = vsel %vm465, %v680, 0.0
        %690 = vadd.xlane.f32.xlu0 %v689
        %v691 = vpop.xlane.xlu0 %690
        %v692 = vsel %vm465, %v682, 0.0
        %693 = vadd.xlane.f32.xlu0 %v692
        %v694 = vpop.xlane.xlu0 %693
        %v695 = vrcp.pop %v685
        %v696 = vrcp.pop %v688
        %v697 = vrcp.pop %v691
        %v698 = vrcp.pop %v694
        %v699 = vmul.f32 %v676, %v695
        %v700 = vmul.f32 %v678, %v696
        %v701 = vmul.f32 %v680, %v697
        %v702 = vmul.f32 %v682, %v698
        %v703 = vpack.c.bf16 %v699, %v699
        %v704 = vpack.c.bf16 %v700, %v700
        %v705 = vpack.c.bf16 %v701, %v701
        %v706 = vpack.c.bf16 %v702, %v702
        %707 = vrot.lane.b32.xlu0 %v458, 64
        %v708 = vpop.permute.xlu0 %707
        %v710 = vsel %vm465, %v703, 0
        %vm712 = vcmask 1043456
        %v714 = vsel %vm712, %v708, 0
        %716 = vmatprep.subr.bf16.mxu0 0
        %717 = vmatpush1.bf16.msra.mxu0 %v714
        %718 = vmatprep.subr.bf16.mxu0 0
        %719 = vmatpush1.bf16.msra.mxu0 0
        %720 = vmatprep.subr.bf16.mxu0 0
        %721 = vmatpush1.bf16.msra.mxu0 0
        %722 = vmatprep.subr.bf16.mxu0 0
        %723 = vmatpush1.bf16.msra.mxu0 0
        %724 = vmatprep.subr.bf16.mxu0 0
        %725 = vmatpush1.bf16.msra.mxu0 0
        %726 = vmatprep.subr.bf16.mxu0 0
        %727 = vmatpush1.bf16.msra.mxu0 0
        %728 = vmatprep.subr.bf16.mxu0 0
        %729 = vmatpush1.bf16.msra.mxu0 0
        %730 = vmatprep.subr.bf16.mxu0 0
        %731 = vmatpush1.bf16.msra.mxu0 0
        %732 = vmatprep.subr.bf16.mxu0 0
        %733 = vmatpush1.bf16.msra.mxu0 0
        %734 = vmatprep.subr.bf16.mxu0 0
        %735 = vmatpush1.bf16.msra.mxu0 0
        %736 = vmatprep.subr.bf16.mxu0 0
        %737 = vmatpush1.bf16.msra.mxu0 0
        %738 = vmatprep.subr.bf16.mxu0 0
        %739 = vmatpush1.bf16.msra.mxu0 0
        %740 = vmatprep.subr.bf16.mxu0 0
        %741 = vmatpush1.bf16.msra.mxu0 0
        %742 = vmatprep.subr.bf16.mxu0 0
        %743 = vmatpush1.bf16.msra.mxu0 0
        %744 = vmatprep.subr.bf16.mxu0 0
        %745 = vmatpush1.bf16.msra.mxu0 0
        %746 = vmatprep.subr.bf16.mxu0 0
        %747 = vmatpush1.bf16.msra.mxu0 0
        %748 = vmatprep.mubr.bf16.mxu0 0
        %749 = vmatmul.mubr.bf16.gmra.mrb[0].mxu0 %v710
        %v750 = vpop.f32.mrb[0].mxu0
        %v751 = vadd.f32 0.0, %v750
        %v752 = vpop.f32.mrb[0].mxu0
        %v753 = vpop.f32.mrb[0].mxu0
        %v754 = vpop.f32.mrb[0].mxu0
        %755 = vdwg.mxu0
        %756 = vrot.lane.b32.xlu0 %v459, 64
        %v757 = vpop.permute.xlu0 %756
        %v759 = vsel %vm465, %v704, 0
        %v762 = vsel %vm712, %v757, 0
        %764 = vmatprep.subr.bf16.mxu0 0
        %765 = vmatpush1.bf16.msra.mxu0 %v762
        %766 = vmatprep.subr.bf16.mxu0 0
        %767 = vmatpush1.bf16.msra.mxu0 0
        %768 = vmatprep.subr.bf16.mxu0 0
        %769 = vmatpush1.bf16.msra.mxu0 0
        %770 = vmatprep.subr.bf16.mxu0 0
        %771 = vmatpush1.bf16.msra.mxu0 0
        %772 = vmatprep.subr.bf16.mxu0 0
        %773 = vmatpush1.bf16.msra.mxu0 0
        %774 = vmatprep.subr.bf16.mxu0 0
        %775 = vmatpush1.bf16.msra.mxu0 0
        %776 = vmatprep.subr.bf16.mxu0 0
        %777 = vmatpush1.bf16.msra.mxu0 0
        %778 = vmatprep.subr.bf16.mxu0 0
        %779 = vmatpush1.bf16.msra.mxu0 0
        %780 = vmatprep.subr.bf16.mxu0 0
        %781 = vmatpush1.bf16.msra.mxu0 0
        %782 = vmatprep.subr.bf16.mxu0 0
        %783 = vmatpush1.bf16.msra.mxu0 0
        %784 = vmatprep.subr.bf16.mxu0 0
        %785 = vmatpush1.bf16.msra.mxu0 0
        %786 = vmatprep.subr.bf16.mxu0 0
        %787 = vmatpush1.bf16.msra.mxu0 0
        %788 = vmatprep.subr.bf16.mxu0 0
        %789 = vmatpush1.bf16.msra.mxu0 0
        %790 = vmatprep.subr.bf16.mxu0 0
        %791 = vmatpush1.bf16.msra.mxu0 0
        %792 = vmatprep.subr.bf16.mxu0 0
        %793 = vmatpush1.bf16.msra.mxu0 0
        %794 = vmatprep.subr.bf16.mxu0 0
        %795 = vmatpush1.bf16.msra.mxu0 0
        %796 = vmatprep.mubr.bf16.mxu0 0
        %797 = vmatmul.mubr.bf16.gmra.mrb[0].mxu0 %v759
        %v798 = vpop.f32.mrb[0].mxu0
        %v799 = vadd.f32 0.0, %v798
        %v800 = vpop.f32.mrb[0].mxu0
        %v801 = vpop.f32.mrb[0].mxu0
        %v802 = vpop.f32.mrb[0].mxu0
        %803 = vdwg.mxu0
        %804 = vrot.lane.b32.xlu0 %v460, 64
        %v805 = vpop.permute.xlu0 %804
        %v807 = vsel %vm465, %v705, 0
        %v810 = vsel %vm712, %v805, 0
        %812 = vmatprep.subr.bf16.mxu0 0
        %813 = vmatpush1.bf16.msra.mxu0 %v810
        %814 = vmatprep.subr.bf16.mxu0 0
        %815 = vmatpush1.bf16.msra.mxu0 0
        %816 = vmatprep.subr.bf16.mxu0 0
        %817 = vmatpush1.bf16.msra.mxu0 0
        %818 = vmatprep.subr.bf16.mxu0 0
        %819 = vmatpush1.bf16.msra.mxu0 0
        %820 = vmatprep.subr.bf16.mxu0 0
        %821 = vmatpush1.bf16.msra.mxu0 0
        %822 = vmatprep.subr.bf16.mxu0 0
        %823 = vmatpush1.bf16.msra.mxu0 0
        %824 = vmatprep.subr.bf16.mxu0 0
        %825 = vmatpush1.bf16.msra.mxu0 0
        %826 = vmatprep.subr.bf16.mxu0 0
        %827 = vmatpush1.bf16.msra.mxu0 0
        %828 = vmatprep.subr.bf16.mxu0 0
        %829 = vmatpush1.bf16.msra.mxu0 0
        %830 = vmatprep.subr.bf16.mxu0 0
        %831 = vmatpush1.bf16.msra.mxu0 0
        %832 = vmatprep.subr.bf16.mxu0 0
        %833 = vmatpush1.bf16.msra.mxu0 0
        %834 = vmatprep.subr.bf16.mxu0 0
        %835 = vmatpush1.bf16.msra.mxu0 0
        %836 = vmatprep.subr.bf16.mxu0 0
        %837 = vmatpush1.bf16.msra.mxu0 0
        %838 = vmatprep.subr.bf16.mxu0 0
        %839 = vmatpush1.bf16.msra.mxu0 0
        %840 = vmatprep.subr.bf16.mxu0 0
        %841 = vmatpush1.bf16.msra.mxu0 0
        %842 = vmatprep.subr.bf16.mxu0 0
        %843 = vmatpush1.bf16.msra.mxu0 0
        %844 = vmatprep.mubr.bf16.mxu0 0
        %845 = vmatmul.mubr.bf16.gmra.mrb[0].mxu0 %v807
        %v846 = vpop.f32.mrb[0].mxu0
        %v847 = vadd.f32 0.0, %v846
        %v848 = vpop.f32.mrb[0].mxu0
        %v849 = vpop.f32.mrb[0].mxu0
        %v850 = vpop.f32.mrb[0].mxu0
        %851 = vdwg.mxu0
        %852 = vrot.lane.b32.xlu0 %v461, 64
        %v853 = vpop.permute.xlu0 %852
        %v855 = vsel %vm465, %v706, 0
        %v858 = vsel %vm712, %v853, 0
        %860 = vmatprep.subr.bf16.mxu0 0
        %861 = vmatpush1.bf16.msra.mxu0 %v858
        %862 = vmatprep.subr.bf16.mxu0 0
        %863 = vmatpush1.bf16.msra.mxu0 0
        %864 = vmatprep.subr.bf16.mxu0 0
        %865 = vmatpush1.bf16.msra.mxu0 0
        %866 = vmatprep.subr.bf16.mxu0 0
        %867 = vmatpush1.bf16.msra.mxu0 0
        %868 = vmatprep.subr.bf16.mxu0 0
        %869 = vmatpush1.bf16.msra.mxu0 0
        %870 = vmatprep.subr.bf16.mxu0 0
        %871 = vmatpush1.bf16.msra.mxu0 0
        %872 = vmatprep.subr.bf16.mxu0 0
        %873 = vmatpush1.bf16.msra.mxu0 0
        %874 = vmatprep.subr.bf16.mxu0 0
        %875 = vmatpush1.bf16.msra.mxu0 0
        %876 = vmatprep.subr.bf16.mxu0 0
        %877 = vmatpush1.bf16.msra.mxu0 0
        %878 = vmatprep.subr.bf16.mxu0 0
        %879 = vmatpush1.bf16.msra.mxu0 0
        %880 = vmatprep.subr.bf16.mxu0 0
        %881 = vmatpush1.bf16.msra.mxu0 0
        %882 = vmatprep.subr.bf16.mxu0 0
        %883 = vmatpush1.bf16.msra.mxu0 0
        %884 = vmatprep.subr.bf16.mxu0 0
        %885 = vmatpush1.bf16.msra.mxu0 0
        %886 = vmatprep.subr.bf16.mxu0 0
        %887 = vmatpush1.bf16.msra.mxu0 0
        %888 = vmatprep.subr.bf16.mxu0 0
        %889 = vmatpush1.bf16.msra.mxu0 0
        %890 = vmatprep.subr.bf16.mxu0 0
        %891 = vmatpush1.bf16.msra.mxu0 0
        %892 = vmatprep.mubr.bf16.mxu0 0
        %893 = vmatmul.mubr.bf16.gmra.mrb[0].mxu0 %v855
        %v894 = vpop.f32.mrb[0].mxu0
        %v895 = vadd.f32 0.0, %v894
        %v896 = vpop.f32.mrb[0].mxu0
        %v897 = vpop.f32.mrb[0].mxu0
        %v898 = vpop.f32.mrb[0].mxu0
        %899 = vdwg.mxu0
        %901 = vrot.lane.b32.xlu0 %v799, 8
        %v902 = vpop.permute.xlu0 %901
        %905 = vrot.lane.b32.xlu0 %v847, 16
        %v906 = vpop.permute.xlu0 %905
        %909 = vrot.lane.b32.xlu0 %v895, 24
        %v910 = vpop.permute.xlu0 %909
        %v912 = vsel %vm465, %v751, %v902
        %vm913 = vcmask 130048
        %v914 = vsel %vm913, %v912, %v906
        %vm915 = vcmask 195584
        %v916 = vsel %vm915, %v914, %v910
        %v917 = vadd.f32 %v916, %v356
        %v918 = vld [vmem:[%s4] sm:$0x1]
        %v919 = vld [vmem:[%s5] sm:$0x1]
        %v920 = vsel %vm359, %v917, 0.0
        %921 = vadd.xlane.f32.xlu0 %v920
        %v922 = vpop.xlane.xlu0 %921
        %v923 = vmul.f32 %v922, %v363
        %v924 = vsub.f32 %v917, %v923
        %v925 = vmul.f32 %v924, %v924
        %v926 = vsel %vm359, %v925, 0.0
        %927 = vadd.xlane.f32.xlu0 %v926
        %v928 = vpop.xlane.xlu0 %927
        %v929 = vmul.f32 %v928, %v363
        %v930 = vadd.f32 %v929, 1e-05
        %v931 = vrsqrt.pop %v930
        %v932 = vmul.f32 %v924, %v931
        %v934 = vlaneseq
        %v935 = vshrl.u32 %v934, 7
        %v936 = vsub.s32 0, %v935
        %v937 = vrot.slane %v918, %v936
        %v939 = vmul.f32 %v932, %v937
        %v941 = vlaneseq
        %v942 = vshrl.u32 %v941, 7
        %v943 = vsub.s32 0, %v942
        %v944 = vrot.slane %v919, %v943
        %v946 = vadd.f32 %v939, %v944
        %v947 = vpack.c.bf16 %v946, %v946
        %v948 = vld [vmem:[%s6] sm:$0xf]
        %v949 = vld [vmem:[%s6 + $0x4] sm:$0xf]
        %v950 = vld [vmem:[%s6 + $0x8] sm:$0xf]
        %v951 = vld [vmem:[%s6 + $0xc] sm:$0xf]
        %v952 = vld [vmem:[%s7] sm:$0x1]
        %v954 = vlaneseq
        %v955 = vshrl.u32 %v954, 7
        %v956 = vsub.s32 0, %v955
        %v957 = vrot.slane %v952, %v956
        %v963 = vunpack.c.l.b16 %v948
        %v964 = vunpack.c.l.b16 %v949
        %v965 = vunpack.c.l.b16 %v950
        %v966 = vunpack.c.l.b16 %v951
        %v967 = vpack.c.b16 %v964, %v963
        %v968 = vpack.c.b16 %v966, %v965
        %v972 = vsel %vm359, %v947, 0
        %974 = vmatprep.subr.bf16.mxu0 0
        %975 = vmatpush1.bf16.msra.mxu0 %v967
        %976 = vmatprep.subr.bf16.mxu0 0
        %977 = vmatpush1.bf16.msra.mxu0 %v968
        %978 = vmatprep.subr.bf16.mxu0 0
        %979 = vmatpush1.bf16.msra.mxu0 0
        %980 = vmatprep.subr.bf16.mxu0 0
        %981 = vmatpush1.bf16.msra.mxu0 0
        %982 = vmatprep.subr.bf16.mxu0 0
        %983 = vmatpush1.bf16.msra.mxu0 0
        %984 = vmatprep.subr.bf16.mxu0 0
        %985 = vmatpush1.bf16.msra.mxu0 0
        %986 = vmatprep.subr.bf16.mxu0 0
        %987 = vmatpush1.bf16.msra.mxu0 0
        %988 = vmatprep.subr.bf16.mxu0 0
        %989 = vmatpush1.bf16.msra.mxu0 0
        %990 = vmatprep.subr.bf16.mxu0 0
        %991 = vmatpush1.bf16.msra.mxu0 0
        %992 = vmatprep.subr.bf16.mxu0 0
        %993 = vmatpush1.bf16.msra.mxu0 0
        %994 = vmatprep.subr.bf16.mxu0 0
        %995 = vmatpush1.bf16.msra.mxu0 0
        %996 = vmatprep.subr.bf16.mxu0 0
        %997 = vmatpush1.bf16.msra.mxu0 0
        %998 = vmatprep.subr.bf16.mxu0 0
        %999 = vmatpush1.bf16.msra.mxu0 0
        %1000 = vmatprep.subr.bf16.mxu0 0
        %1001 = vmatpush1.bf16.msra.mxu0 0
        %1002 = vmatprep.subr.bf16.mxu0 0
        %1003 = vmatpush1.bf16.msra.mxu0 0
        %1004 = vmatprep.subr.bf16.mxu0 0
        %1005 = vmatpush1.bf16.msra.mxu0 0
        %1006 = vmatprep.mubr.bf16.mxu0 0
        %1007 = vmatmul.mubr.bf16.gmra.mrb[0].mxu0 %v972
        %v1008 = vpop.f32.mrb[0].mxu0
        %v1009 = vadd.f32 %v957, %v1008
        %v1010 = vpop.f32.mrb[0].mxu0
        %v1011 = vpop.f32.mrb[0].mxu0
        %v1012 = vpop.f32.mrb[0].mxu0
        %1013 = vdwg.mxu0
        %v1014 = vmul.f32 %v1009, 0.5
        %v1015 = vmul.f32 %v1009, 0.70710677
        %v1016 = verf.f32.pop %v1015
        %v1017 = vadd.f32 %v1016, 1.0
        %v1018 = vmul.f32 %v1014, %v1017
        %v1019 = vpack.c.bf16 %v1018, %v1018
        %v1020 = vld [vmem:[%s8] sm:$0xf]
        %v1021 = vld [vmem:[%s8 + $0x4] sm:$0xf]
        %v1022 = vld [vmem:[%s8 + $0x8] sm:$0xf]
        %v1023 = vld [vmem:[%s8 + $0xc] sm:$0xf]
        %v1024 = vld [vmem:[%s8 + $0x10] sm:$0xf]
        %v1025 = vld [vmem:[%s8 + $0x14] sm:$0xf]
        %v1026 = vld [vmem:[%s8 + $0x18] sm:$0xf]
        %v1027 = vld [vmem:[%s8 + $0x1c] sm:$0xf]
        %v1028 = vld [vmem:[%s8 + $0x20] sm:$0xf]
        %v1029 = vld [vmem:[%s8 + $0x24] sm:$0xf]
        %v1030 = vld [vmem:[%s8 + $0x28] sm:$0xf]
        %v1031 = vld [vmem:[%s8 + $0x2c] sm:$0xf]
        %v1032 = vld [vmem:[%s8 + $0x30] sm:$0xf]
        %v1033 = vld [vmem:[%s8 + $0x34] sm:$0xf]
        %v1034 = vld [vmem:[%s8 + $0x38] sm:$0xf]
        %v1035 = vld [vmem:[%s8 + $0x3c] sm:$0xf]
        %v1036 = vld [vmem:[%s9] sm:$0x1]
        %v1038 = vlaneseq
        %v1039 = vshrl.u32 %v1038, 7
        %v1040 = vsub.s32 0, %v1039
        %v1041 = vrot.slane %v1036, %v1040
        %v1059 = vunpack.c.l.b16 %v1020
        %v1060 = vunpack.c.l.b16 %v1021
        %v1061 = vunpack.c.l.b16 %v1022
        %v1062 = vunpack.c.l.b16 %v1023
        %v1063 = vunpack.c.l.b16 %v1024
        %v1064 = vunpack.c.l.b16 %v1025
        %v1065 = vunpack.c.l.b16 %v1026
        %v1066 = vunpack.c.l.b16 %v1027
        %v1067 = vunpack.c.l.b16 %v1028
        %v1068 = vunpack.c.l.b16 %v1029
        %v1069 = vunpack.c.l.b16 %v1030
        %v1070 = vunpack.c.l.b16 %v1031
        %v1071 = vunpack.c.l.b16 %v1032
        %v1072 = vunpack.c.l.b16 %v1033
        %v1073 = vunpack.c.l.b16 %v1034
        %v1074 = vunpack.c.l.b16 %v1035
        %v1075 = vpack.c.b16 %v1060, %v1059
        %v1076 = vpack.c.b16 %v1062, %v1061
        %v1077 = vpack.c.b16 %v1064, %v1063
        %v1078 = vpack.c.b16 %v1066, %v1065
        %v1079 = vpack.c.b16 %v1068, %v1067
        %v1080 = vpack.c.b16 %v1070, %v1069
        %v1081 = vpack.c.b16 %v1072, %v1071
        %v1082 = vpack.c.b16 %v1074, %v1073
        %1091 = vmatprep.subr.bf16.mxu0 0
        %1092 = vmatpush1.bf16.msra.mxu0 %v1075
        %1093 = vmatprep.subr.bf16.mxu0 0
        %1094 = vmatpush1.bf16.msra.mxu0 %v1076
        %1095 = vmatprep.subr.bf16.mxu0 0
        %1096 = vmatpush1.bf16.msra.mxu0 %v1077
        %1097 = vmatprep.subr.bf16.mxu0 0
        %1098 = vmatpush1.bf16.msra.mxu0 %v1078
        %1099 = vmatprep.subr.bf16.mxu0 0
        %1100 = vmatpush1.bf16.msra.mxu0 %v1079
        %1101 = vmatprep.subr.bf16.mxu0 0
        %1102 = vmatpush1.bf16.msra.mxu0 %v1080
        %1103 = vmatprep.subr.bf16.mxu0 0
        %1104 = vmatpush1.bf16.msra.mxu0 %v1081
        %1105 = vmatprep.subr.bf16.mxu0 0
        %1106 = vmatpush1.bf16.msra.mxu0 %v1082
        %1107 = vmatprep.subr.bf16.mxu0 0
        %1108 = vmatpush1.bf16.msra.mxu0 0
        %1109 = vmatprep.subr.bf16.mxu0 0
        %1110 = vmatpush1.bf16.msra.mxu0 0
        %1111 = vmatprep.subr.bf16.mxu0 0
        %1112 = vmatpush1.bf16.msra.mxu0 0
        %1113 = vmatprep.subr.bf16.mxu0 0
        %1114 = vmatpush1.bf16.msra.mxu0 0
        %1115 = vmatprep.subr.bf16.mxu0 0
        %1116 = vmatpush1.bf16.msra.mxu0 0
        %1117 = vmatprep.subr.bf16.mxu0 0
        %1118 = vmatpush1.bf16.msra.mxu0 0
        %1119 = vmatprep.subr.bf16.mxu0 0
        %1120 = vmatpush1.bf16.msra.mxu0 0
        %1121 = vmatprep.subr.bf16.mxu0 0
        %1122 = vmatpush1.bf16.msra.mxu0 0
        %1123 = vmatprep.mubr.bf16.mxu0 0
        %1124 = vmatmul.mubr.bf16.gmra.mrb[0].mxu0 %v1019
        %v1125 = vpop.f32.mrb[0].mxu0
        %v1126 = vadd.f32 %v1041, %v1125
        %v1127 = vpop.f32.mrb[0].mxu0
        %v1128 = vpop.f32.mrb[0].mxu0
        %v1129 = vpop.f32.mrb[0].mxu0
        %1130 = vdwg.mxu0
        %v1131 = vadd.f32 %v1126, %v917
        %1132 = vst.msk [vmem:[%s350] sm:$0xff] %vm359, %v1131
        %s1133 = sand.u32 %s247, 1
        %s1134 = scalar_lea.sflag [#allocation3], %s1133
        %s1135 = sand.u32 %s247, 1
        %s1136 = smul.addr %s1135, 8
        %s1137 = scalar_lea.vmem [#allocation2], %s1136
        // Predicated region
        $region61: #{tpu_custom_call.1} parent=59 // pred_check
          %p1138 = pneg %p257
        $region62: #{tpu_custom_call.1} parent=59 // pred_check_branch
          %1140 = sbr.rel (%p1138) target = $region64
        $region63: #{tpu_custom_call.1} parent=59 // pred_region
          %s1142 = ssub.s32 128, 128
          %1143 = vsyncadd %s1134, %s1142
          %s1144 = smul.addr %s24, 128
          %s1145 = scalar_lea.hbm %s10, %s1144
          %s1147 = sshll.u32 %s1137, 4
          %s1148 = int_to_ptr.vmem [resolvable:$true] %s1147
          %1150 = dma.vmem_to_hbm [thread:$0]  %s1148, 128, %s1145, %s1134
        $region64: #{tpu_custom_call.1} parent=59 // pred_fallthru
          _
      $region60: #{tpu_custom_call.1} parent=5 // pred_fallthru
        _
      %p1151 = scmp.le.s32.totalorder 2, %s19
      // Predicated region
      $region65: #{tpu_custom_call.1} parent=5 // pred_check
        %p1152 = pneg %p1151
      $region66: #{tpu_custom_call.1} parent=5 // pred_check_branch
        %1154 = sbr.rel (%p1152) target = $region68
      $region67: #{tpu_custom_call.1} parent=5 // pred_region
        %s1155 = ssub.s32 %s19, 2
        // Predicated region
        $region69: #{tpu_custom_call.1} parent=67 // pred_check
          %p1156 = pneg %p263
        $region70: #{tpu_custom_call.1} parent=67 // pred_check_branch
          %1158 = sbr.rel (%p1156) target = $region72
        $region71: #{tpu_custom_call.1} parent=67 // pred_region
          %s1159 = sand.u32 %s248, 1
          %s1160 = scalar_lea.sflag [#allocation3], %s1159
          %s1161 = sand.u32 %s248, 1
          %s1162 = smul.addr %s1161, 8
          %s1163 = scalar_lea.vmem [#allocation2], %s1162
          %1164 = dma.done %s1160, 128
        $region72: #{tpu_custom_call.1} parent=67 // pred_fallthru
          _
      $region68: #{tpu_custom_call.1} parent=5 // pred_fallthru
        _
    $region6: #{tpu_custom_call.1} parent=1 // loop_footer
      %s23 = sadd.s32 1, %s19
    $region7: #{tpu_custom_call.1} parent=1 // loop_footer_branch
      %18 = sbr.rel target = $region3
    $region8: #{tpu_custom_call.1} parent=1 // loop_exit
      _
    %1165 = vsyncpa [#allocation3], 1
    %s1166 = scalar_lea.sflag [#allocation3], 1
    %1167 = vsyncpa %s1166, 1

// kernel: tpu_custom_call.1
$region0: #{tpu_custom_call.1}
  #allocation0 [shape = 'u32[]', space=smem, size = 0x4, offset = 0x4, fixed_abs, tag = 'smem constant byte address 0x4 - core index']
  #allocation1 [shape = 'u32[144,128]{1,0:T(1,128)}', space=vmem, size = 0x12000, scoped, tag = 'internal scratch']
  %s0 = inlined_call_operand.vmem [shape: f32[2,8,32], index: 0, kind: input, shape index: {}]
  %s1 = inlined_call_operand.vmem [shape: f32[1,32], index: 1, kind: input, shape index: {}]
  %s2 = inlined_call_operand.vmem [shape: f32[1,32], index: 2, kind: input, shape index: {}]
  %s3 = inlined_call_operand.vmem [shape: bf16[32,96], index: 3, kind: input, shape index: {}]
  %s4 = inlined_call_operand.vmem [shape: f32[1,32], index: 4, kind: input, shape index: {}]
  %s5 = inlined_call_operand.vmem [shape: f32[1,32], index: 5, kind: input, shape index: {}]
  %s6 = inlined_call_operand.vmem [shape: bf16[32,128], index: 6, kind: input, shape index: {}]
  %s7 = inlined_call_operand.vmem [shape: f32[1,128], index: 7, kind: input, shape index: {}]
  %s8 = inlined_call_operand.vmem [shape: bf16[128,32], index: 8, kind: input, shape index: {}]
  %s9 = inlined_call_operand.vmem [shape: f32[1,32], index: 9, kind: input, shape index: {}]
  %s10 = inlined_call_operand.hbm [shape: f32[2,8,32], index: 10, kind: output, shape index: {}]
  %s11 = sld [smem:[#allocation0]]
  $region73: #{tpu_custom_call.1} parent=0
    _
  %s13 = ssub.s32 1, %s11
  %s14 = scalar_select 0, %s13, %s11
  $region1: #{tpu_custom_call.1} parent=0
    #allocation2 [shape = 'u8[8192]{0}', space=vmem, size = 0x2000, scoped, tag = 'output window, operand 0']
    #allocation3 [shape = 's32[2]{0}', space=sflag, size = 0x8, scoped, tag = 'scoped memory for tpu_custom_call.1']
    %15 = vsyncpa [#allocation3], 0
    %s16 = scalar_lea.sflag [#allocation3], 1
    %17 = vsyncpa %s16, 0
    loop: start=0, step=1, limit=4
    $region2: #{tpu_custom_call.1} parent=1 // loop_pre_header
      _
    $region3: #{tpu_custom_call.1} parent=1 // loop_header
      %s19 = sphi 0, %s23
      %p20 = scmp.ge.s32.totalorder %s19, 4
      %s29 = sphi 0, %s31
      %s32 = sphi 0, %s29
      %s33 = sphi 0, %s32
      %s49 = sphi 0, %s33
      %s53 = sphi 0, %s53
      %s55 = sphi 0, %s53
      %s56 = sphi 0, %s55
      %s70 = sphi 0, %s56
      %s74 = sphi 0, %s74
      %s76 = sphi 0, %s74
      %s77 = sphi 0, %s76
      %s91 = sphi 0, %s77
      %s95 = sphi 0, %s95
      %s97 = sphi 0, %s95
      %s98 = sphi 0, %s97
      %s112 = sphi 0, %s98
      %s116 = sphi 0, %s116
      %s118 = sphi 0, %s116
      %s119 = sphi 0, %s118
      %s133 = sphi 0, %s119
      %s137 = sphi 0, %s137
      %s139 = sphi 0, %s137
      %s140 = sphi 0, %s139
      %s154 = sphi 0, %s140
      %s158 = sphi 0, %s158
      %s160 = sphi 0, %s158
      %s161 = sphi 0, %s160
      %s175 = sphi 0, %s161
      %s179 = sphi 0, %s179
      %s181 = sphi 0, %s179
      %s182 = sphi 0, %s181
      %s196 = sphi 0, %s182
      %s200 = sphi 0, %s200
      %s202 = sphi 0, %s200
      %s203 = sphi 0, %s202
      %s217 = sphi 0, %s203
      %s221 = sphi 0, %s221
      %s223 = sphi 0, %s221
      %s224 = sphi 0, %s223
      %s238 = sphi 0, %s224
      %s244 = sphi 0, %s246
      %s247 = sphi 0, %s244
      %s248 = sphi 0, %s247
      %s264 = sphi 0, %s248
    $region4: #{tpu_custom_call.1} parent=1 // loop_header_branch
      %22 = sbr.rel (%p20) target = $region8
    $region5: #{tpu_custom_call.1} parent=1 // loop_body
      %s24 = ssub.s32 %s19, 1
      %s25 = ssub.s32 %s19, 2
      %s26 = sadd.s32 %s19, 1
      %s27 = ssub.s32 %s19, %s26
      %p28 = scmp.eq.s32.totalorder %s27, 0
      %s30 = sadd.s32 %s29, 1
      %s31 = scalar_select %p28, %s29, %s30
      %p34 = pneg %p28
      %p35 = scmp.eq.s32.totalorder %s19, 1
      %p36 = por %p34, %p35
      %p37 = scmp.ne.s32.totalorder %s29, %s32
      %p38 = scmp.eq.s32.totalorder %s19, 0
      %p39 = por %p37, %p38
      %p40 = scmp.ne.s32.totalorder %s29, %s32
      %p41 = scmp.eq.s32.totalorder %s24, 1
      %p42 = por %p40, %p41
      %p43 = scmp.ne.s32.totalorder %s32, %s33
      %p44 = scmp.eq.s32.totalorder %s24, 0
      %p45 = por %p43, %p44
      %p46 = scmp.ne.s32.totalorder %s32, %s33
      %p47 = scmp.eq.s32.totalorder %s25, 1
      %p48 = por %p46, %p47
      %p50 = scmp.ne.s32.totalorder %s33, %s49
      %p51 = scmp.eq.s32.totalorder %s25, 0
      %p52 = por %p50, %p51
      %s54 = sadd.s32 %s53, 1
      %p57 = scmp.eq.s32.totalorder %s19, 1
      %p58 = scmp.ne.s32.totalorder %s53, %s55
      %p59 = scmp.eq.s32.totalorder %s19, 0
      %p60 = por %p58, %p59
      %p61 = scmp.ne.s32.totalorder %s53, %s55
      %p62 = scmp.eq.s32.totalorder %s24, 1
      %p63 = por %p61, %p62
      %p64 = scmp.ne.s32.totalorder %s55, %s56
      %p65 = scmp.eq.s32.totalorder %s24, 0
      %p66 = por %p64, %p65
      %p67 = scmp.ne.s32.totalorder %s55, %s56
      %p68 = scmp.eq.s32.totalorder %s25, 1
      %p69 = por %p67, %p68
      %p71 = scmp.ne.s32.totalorder %s56, %s70
      %p72 = scmp.eq.s32.totalorder %s25, 0
      %p73 = por %p71, %p72
      %s75 = sadd.s32 %s74, 1
      %p78 = scmp.eq.s32.totalorder %s19, 1
      %p79 = scmp.ne.s32.totalorder %s74, %s76
      %p80 = scmp.eq.s32.totalorder %s19, 0
      %p81 = por %p79, %p80
      %p82 = scmp.ne.s32.totalorder %s74, %s76
      %p83 = scmp.eq.s32.totalorder %s24, 1
      %p84 = por %p82, %p83
      %p85 = scmp.ne.s32.totalorder %s76, %s77
      %p86 = scmp.eq.s32.totalorder %s24, 0
      %p87 = por %p85, %p86
      %p88 = scmp.ne.s32.totalorder %s76, %s77
      %p89 = scmp.eq.s32.totalorder %s25, 1
      %p90 = por %p88, %p89
      %p92 = scmp.ne.s32.totalorder %s77, %s91
      %p93 = scmp.eq.s32.totalorder %s25, 0
      %p94 = por %p92, %p93
      %s96 = sadd.s32 %s95, 1
      %p99 = scmp.eq.s32.totalorder %s19, 1
      %p100 = scmp.ne.s32.totalorder %s95, %s97
      %p101 = scmp.eq.s32.totalorder %s19, 0
      %p102 = por %p100, %p101
      %p103 = scmp.ne.s32.totalorder %s95, %s97
      %p104 = scmp.eq.s32.totalorder %s24, 1
      %p105 = por %p103, %p104
      %p106 = scmp.ne.s32.totalorder %s97, %s98
      %p107 = scmp.eq.s32.totalorder %s24, 0
      %p108 = por %p106, %p107
      %p109 = scmp.ne.s32.totalorder %s97, %s98
      %p110 = scmp.eq.s32.totalorder %s25, 1
      %p111 = por %p109, %p110
      %p113 = scmp.ne.s32.totalorder %s98, %s112
      %p114 = scmp.eq.s32.totalorder %s25, 0
      %p115 = por %p113, %p114
      %s117 = sadd.s32 %s116, 1
      %p120 = scmp.eq.s32.totalorder %s19, 1
      %p121 = scmp.ne.s32.totalorder %s116, %s118
      %p122 = scmp.eq.s32.totalorder %s19, 0
      %p123 = por %p121, %p122
      %p124 = scmp.ne.s32.totalorder %s116, %s118
      %p125 = scmp.eq.s32.totalorder %s24, 1
      %p126 = por %p124, %p125
      %p127 = scmp.ne.s32.totalorder %s118, %s119
      %p128 = scmp.eq.s32.totalorder %s24, 0
      %p129 = por %p127, %p128
      %p130 = scmp.ne.s32.totalorder %s118, %s119
      %p131 = scmp.eq.s32.totalorder %s25, 1
      %p132 = por %p130, %p131
      %p134 = scmp.ne.s32.totalorder %s119, %s133
      %p135 = scmp.eq.s32.totalorder %s25, 0
      %p136 = por %p134, %p135
      %s138 = sadd.s32 %s137, 1
      %p141 = scmp.eq.s32.totalorder %s19, 1
      %p142 = scmp.ne.s32.totalorder %s137, %s139
      %p143 = scmp.eq.s32.totalorder %s19, 0
      %p144 = por %p142, %p143
      %p145 = scmp.ne.s32.totalorder %s137, %s139
      %p146 = scmp.eq.s32.totalorder %s24, 1
      %p147 = por %p145, %p146
      %p148 = scmp.ne.s32.totalorder %s139, %s140
      %p149 = scmp.eq.s32.totalorder %s24, 0
      %p150 = por %p148, %p149
      %p151 = scmp.ne.s32.totalorder %s139, %s140
      %p152 = scmp.eq.s32.totalorder %s25, 1
      %p153 = por %p151, %p152
      %p155 = scmp.ne.s32.totalorder %s140, %s154
      %p156 = scmp.eq.s32.totalorder %s25, 0
      %p157 = por %p155, %p156
      %s159 = sadd.s32 %s158, 1
      %p162 = scmp.eq.s32.totalorder %s19, 1
      %p163 = scmp.ne.s32.totalorder %s158, %s160
      %p164 = scmp.eq.s32.totalorder %s19, 0
      %p165 = por %p163, %p164
      %p166 = scmp.ne.s32.totalorder %s158, %s160
      %p167 = scmp.eq.s32.totalorder %s24, 1
      %p168 = por %p166, %p167
      %p169 = scmp.ne.s32.totalorder %s160, %s161
      %p170 = scmp.eq.s32.totalorder %s24, 0
      %p171 = por %p169, %p170
      %p172 = scmp.ne.s32.totalorder %s160, %s161
      %p173 = scmp.eq.s32.totalorder %s25, 1
      %p174 = por %p172, %p173
      %p176 = scmp.ne.s32.totalorder %s161, %s175
      %p177 = scmp.eq.s32.totalorder %s25, 0
      %p178 = por %p176, %p177
      %s180 = sadd.s32 %s179, 1
      %p183 = scmp.eq.s32.totalorder %s19, 1
      %p184 = scmp.ne.s32.totalorder %s179, %s181
      %p185 = scmp.eq.s32.totalorder %s19, 0
      %p186 = por %p184, %p185
      %p187 = scmp.ne.s32.totalorder %s179, %s181
      %p188 = scmp.eq.s32.totalorder %s24, 1
      %p189 = por %p187, %p188
      %p190 = scmp.ne.s32.totalorder %s181, %s182
      %p191 = scmp.eq.s32.totalorder %s24, 0
      %p192 = por %p190, %p191
      %p193 = scmp.ne.s32.totalorder %s181, %s182
      %p194 = scmp.eq.s32.totalorder %s25, 1
      %p195 = por %p193, %p194
      %p197 = scmp.ne.s32.totalorder %s182, %s196
      %p198 = scmp.eq.s32.totalorder %s25, 0
      %p199 = por %p197, %p198
      %s201 = sadd.s32 %s200, 1
      %p204 = scmp.eq.s32.totalorder %s19, 1
      %p205 = scmp.ne.s32.totalorder %s200, %s202
      %p206 = scmp.eq.s32.totalorder %s19, 0
      %p207 = por %p205, %p206
      %p208 = scmp.ne.s32.totalorder %s200, %s202
      %p209 = scmp.eq.s32.totalorder %s24, 1
      %p210 = por %p208, %p209
      %p211 = scmp.ne.s32.totalorder %s202, %s203
      %p212 = scmp.eq.s32.totalorder %s24, 0
      %p213 = por %p211, %p212
      %p214 = scmp.ne.s32.totalorder %s202, %s203
      %p215 = scmp.eq.s32.totalorder %s25, 1
      %p216 = por %p214, %p215
      %p218 = scmp.ne.s32.totalorder %s203, %s217
      %p219 = scmp.eq.s32.totalorder %s25, 0
      %p220 = por %p218, %p219
      %s222 = sadd.s32 %s221, 1
      %p225 = scmp.eq.s32.totalorder %s19, 1
      %p226 = scmp.ne.s32.totalorder %s221, %s223
      %p227 = scmp.eq.s32.totalorder %s19, 0
      %p228 = por %p226, %p227
      %p229 = scmp.ne.s32.totalorder %s221, %s223
      %p230 = scmp.eq.s32.totalorder %s24, 1
      %p231 = por %p229, %p230
      %p232 = scmp.ne.s32.totalorder %s223, %s224
      %p233 = scmp.eq.s32.totalorder %s24, 0
      %p234 = por %p232, %p233
      %p235 = scmp.ne.s32.totalorder %s223, %s224
      %p236 = scmp.eq.s32.totalorder %s25, 1
      %p237 = por %p235, %p236
      %p239 = scmp.ne.s32.totalorder %s224, %s238
      %p240 = scmp.eq.s32.totalorder %s25, 0
      %p241 = por %p239, %p240
      %s242 = ssub.s32 %s19, %s26
      %p243 = scmp.eq.s32.totalorder %s242, 0
      %s245 = sadd.s32 %s244, 1
      %s246 = scalar_select %p243, %s244, %s245
      %p249 = pneg %p243
      %p250 = scmp.eq.s32.totalorder %s19, 1
      %p251 = por %p249, %p250
      %p252 = scmp.ne.s32.totalorder %s244, %s247
      %p253 = scmp.eq.s32.totalorder %s19, 0
      %p254 = por %p252, %p253
      %p255 = scmp.ne.s32.totalorder %s244, %s247
      %p256 = scmp.eq.s32.totalorder %s24, 1
      %p257 = por %p255, %p256
      %p258 = scmp.ne.s32.totalorder %s247, %s248
      %p259 = scmp.eq.s32.totalorder %s24, 0
      %p260 = por %p258, %p259
      %p261 = scmp.ne.s32.totalorder %s247, %s248
      %p262 = scmp.eq.s32.totalorder %s25, 1
      %p263 = por %p261, %p262
      %p265 = scmp.ne.s32.totalorder %s248, %s264
      %p266 = scmp.eq.s32.totalorder %s25, 0
      %p267 = por %p265, %p266
      %p268 = scmp.le.s32.totalorder 1, %s19
      %p269 = scmp.lt.s32.totalorder %s19, 3
      %p270 = pnand %p268, %p269
      %p271 = pneg %p270
      // Predicated region
      $region9: #{tpu_custom_call.1} parent=5 // pred_check
        _
      $region10: #{tpu_custom_call.1} parent=5 // pred_check_branch
        %273 = sbr.rel (%p270) target = $region12
      $region11: #{tpu_custom_call.1} parent=5 // pred_region
        %s274 = ssub.s32 %s19, 1
        // Predicated region
        $region13: #{tpu_custom_call.1} parent=11 // pred_check
          %p275 = pneg %p66
        $region14: #{tpu_custom_call.1} parent=11 // pred_check_branch
          %277 = sbr.rel (%p275) target = $region16
        $region15: #{tpu_custom_call.1} parent=11 // pred_region
          _
        $region16: #{tpu_custom_call.1} parent=11 // pred_fallthru
          _
        // Predicated region
        $region17: #{tpu_custom_call.1} parent=11 // pred_check
          %p278 = pneg %p87
        $region18: #{tpu_custom_call.1} parent=11 // pred_check_branch
          %280 = sbr.rel (%p278) target = $region20
        $region19: #{tpu_custom_call.1} parent=11 // pred_region
          _
        $region20: #{tpu_custom_call.1} parent=11 // pred_fallthru
          _
        // Predicated region
        $region21: #{tpu_custom_call.1} parent=11 // pred_check
          %p281 = pneg %p108
        $region22: #{tpu_custom_call.1} parent=11 // pred_check_branch
          %283 = sbr.rel (%p281) target = $region24
        $region23: #{tpu_custom_call.1} parent=11 // pred_region
          _
        $region24: #{tpu_custom_call.1} parent=11 // pred_fallthru
          _
        // Predicated region
        $region25: #{tpu_custom_call.1} parent=11 // pred_check
          %p284 = pneg %p129
        $region26: #{tpu_custom_call.1} parent=11 // pred_check_branch
          %286 = sbr.rel (%p284) target = $region28
        $region27: #{tpu_custom_call.1} parent=11 // pred_region
          _
        $region28: #{tpu_custom_call.1} parent=11 // pred_fallthru
          _
        // Predicated region
        $region29: #{tpu_custom_call.1} parent=11 // pred_check
          %p287 = pneg %p150
        $region30: #{tpu_custom_call.1} parent=11 // pred_check_branch
          %289 = sbr.rel (%p287) target = $region32
        $region31: #{tpu_custom_call.1} parent=11 // pred_region
          _
        $region32: #{tpu_custom_call.1} parent=11 // pred_fallthru
          _
        // Predicated region
        $region33: #{tpu_custom_call.1} parent=11 // pred_check
          %p290 = pneg %p171
        $region34: #{tpu_custom_call.1} parent=11 // pred_check_branch
          %292 = sbr.rel (%p290) target = $region36
        $region35: #{tpu_custom_call.1} parent=11 // pred_region
          _
        $region36: #{tpu_custom_call.1} parent=11 // pred_fallthru
          _
        // Predicated region
        $region37: #{tpu_custom_call.1} parent=11 // pred_check
          %p293 = pneg %p192
        $region38: #{tpu_custom_call.1} parent=11 // pred_check_branch
          %295 = sbr.rel (%p293) target = $region40
        $region39: #{tpu_custom_call.1} parent=11 // pred_region
          _
        $region40: #{tpu_custom_call.1} parent=11 // pred_fallthru
          _
        // Predicated region
        $region41: #{tpu_custom_call.1} parent=11 // pred_check
          %p296 = pneg %p213
        $region42: #{tpu_custom_call.1} parent=11 // pred_check_branch
          %298 = sbr.rel (%p296) target = $region44
        $region43: #{tpu_custom_call.1} parent=11 // pred_region
          _
        $region44: #{tpu_custom_call.1} parent=11 // pred_fallthru
          _
        // Predicated region
        $region45: #{tpu_custom_call.1} parent=11 // pred_check
          %p299 = pneg %p234
        $region46: #{tpu_custom_call.1} parent=11 // pred_check_branch
          %301 = sbr.rel (%p299) target = $region48
        $region47: #{tpu_custom_call.1} parent=11 // pred_region
          _
        $region48: #{tpu_custom_call.1} parent=11 // pred_fallthru
          _
      $region12: #{tpu_custom_call.1} parent=5 // pred_fallthru
        _
      %p302 = scmp.lt.s32.totalorder %s19, 2
      // Predicated region
      $region49: #{tpu_custom_call.1} parent=5 // pred_check
        %p303 = pneg %p302
      $region50: #{tpu_custom_call.1} parent=5 // pred_check_branch
        %305 = sbr.rel (%p303) target = $region52
      $region51: #{tpu_custom_call.1} parent=5 // pred_region
        // Predicated region
        $region53: #{tpu_custom_call.1} parent=51 // pred_check
          %p306 = pneg %p39
        $region54: #{tpu_custom_call.1} parent=51 // pred_check_branch
          %308 = sbr.rel (%p306) target = $region56
        $region55: #{tpu_custom_call.1} parent=51 // pred_region
          %p309 = scmp.lt.s32.totalorder %s19, 1
          %s310 = scalar_select %p309, %s19, 1
          %s311 = smul.addr %s310, 8
          %s312 = scalar_lea.vmem %s0, %s311
        $region56: #{tpu_custom_call.1} parent=51 // pred_fallthru
          _
      $region52: #{tpu_custom_call.1} parent=5 // pred_fallthru
        _
      %p313 = scmp.le.s32.totalorder 1, %s19
      %p314 = scmp.lt.s32.totalorder %s19, 3
      %p315 = pnand %p313, %p314
      %p316 = pneg %p315
      // Predicated region
      $region57: #{tpu_custom_call.1} parent=5 // pred_check
        _
      $region58: #{tpu_custom_call.1} parent=5 // pred_check_branch
        %318 = sbr.rel (%p315) target = $region60
      $region59: #{tpu_custom_call.1} parent=5 // pred_region
        %s319 = ssub.s32 %s19, 1
        %p320 = scmp.lt.s32.totalorder %s24, 1
        %s321 = scalar_select %p320, %s24, 1
        %s322 = smul.addr %s321, 8
        %s323 = scalar_lea.vmem %s0, %s322
        %p324 = pneg %p45
        %p325 = pneg %p42
        %p326 = pneg %p66
        %p327 = pneg %p63
        %p328 = pneg %p87
        %p329 = pneg %p84
        %p330 = pneg %p108
        %p331 = pneg %p105
        %p332 = pneg %p129
        %p333 = pneg %p126
        %p334 = pneg %p150
        %p335 = pneg %p147
        %p336 = pneg %p171
        %p337 = pneg %p168
        %p338 = pneg %p192
        %p339 = pneg %p189
        %p340 = pneg %p213
        %p341 = pneg %p210
        %p342 = pneg %p234
        %p343 = pneg %p231
        %p344 = pneg %p260
        %p345 = pneg %p257
        %s346 = sand.u32 %s247, 1
        %s347 = scalar_lea.sflag [#allocation3], %s346
        %s348 = sand.u32 %s247, 1
        %s349 = smul.addr %s348, 8
        %s350 = scalar_lea.vmem [#allocation2], %s349
        %p351 = scmp.lt.s32.totalorder %s24, 1
        %s352 = scalar_select %p351, %s24, 1
        %s353 = smul.addr %s352, 8
        %s354 = scalar_lea.vmem %s0, %s353
        %v356 = vld [vmem:[%s354] sm:$0xff]
        %v357 = vld [vmem:[%s1] sm:$0x1]
        %v358 = vld [vmem:[%s2] sm:$0x1]
        %vm359 = vcmask 261120
        %v360 = vsel %vm359, %v356, 0.0
        %361 = vadd.xlane.f32.xlu0 %v360
        %v362 = vpop.xlane.xlu0 %361
        %v363 = vrcp.pop 32.0
        %v364 = vmul.f32 %v362, %v363
        %v365 = vsub.f32 %v356, %v364
        %v366 = vmul.f32 %v365, %v365
        %v367 = vsel %vm359, %v366, 0.0
        %368 = vadd.xlane.f32.xlu0 %v367
        %v369 = vpop.xlane.xlu0 %368
        %v370 = vmul.f32 %v369, %v363
        %v371 = vadd.f32 %v370, 1e-05
        %v372 = vrsqrt.pop %v371
        %v373 = vmul.f32 %v365, %v372
        %v375 = vlaneseq
        %v376 = vshrl.u32 %v375, 7
        %v377 = vsub.s32 0, %v376
        %v378 = vrot.slane %v357, %v377
        %v380 = vmul.f32 %v373, %v378
        %v382 = vlaneseq
        %v383 = vshrl.u32 %v382, 7
        %v384 = vsub.s32 0, %v383
        %v385 = vrot.slane %v358, %v384
        %v387 = vadd.f32 %v380, %v385
        %v388 = vpack.c.bf16 %v387, %v387
        %v389 = vld [vmem:[%s3] sm:$0xf]
        %v390 = vld [vmem:[%s3 + $0x4] sm:$0xf]
        %v391 = vld [vmem:[%s3 + $0x8] sm:$0xf]
        %v392 = vld [vmem:[%s3 + $0xc] sm:$0xf]
        %v397 = vunpack.c.l.b16 %v389
        %v398 = vunpack.c.l.b16 %v390
        %v399 = vunpack.c.l.b16 %v391
        %v400 = vunpack.c.l.b16 %v392
        %v401 = vpack.c.b16 %v398, %v397
        %v402 = vpack.c.b16 %v400, %v399
        %v406 = vsel %vm359, %v388, 0
        %408 = vmatprep.subr.bf16.mxu0 0
        %409 = vmatpush1.bf16.msra.mxu0 %v401
        %410 = vmatprep.subr.bf16.mxu0 0
        %411 = vmatpush1.bf16.msra.mxu0 %v402
        %412 = vmatprep.subr.bf16.mxu0 0
        %413 = vmatpush1.bf16.msra.mxu0 0
        %414 = vmatprep.subr.bf16.mxu0 0
        %415 = vmatpush1.bf16.msra.mxu0 0
        %416 = vmatprep.subr.bf16.mxu0 0
        %417 = vmatpush1.bf16.msra.mxu0 0
        %418 = vmatprep.subr.bf16.mxu0 0
        %419 = vmatpush1.bf16.msra.mxu0 0
        %420 = vmatprep.subr.bf16.mxu0 0
        %421 = vmatpush1.bf16.msra.mxu0 0
        %422 = vmatprep.subr.bf16.mxu0 0
        %423 = vmatpush1.bf16.msra.mxu0 0
        %424 = vmatprep.subr.bf16.mxu0 0
        %425 = vmatpush1.bf16.msra.mxu0 0
        %426 = vmatprep.subr.bf16.mxu0 0
        %427 = vmatpush1.bf16.msra.mxu0 0
        %428 = vmatprep.subr.bf16.mxu0 0
        %429 = vmatpush1.bf16.msra.mxu0 0
        %430 = vmatprep.subr.bf16.mxu0 0
        %431 = vmatpush1.bf16.msra.mxu0 0
        %432 = vmatprep.subr.bf16.mxu0 0
        %433 = vmatpush1.bf16.msra.mxu0 0
        %434 = vmatprep.subr.bf16.mxu0 0
        %435 = vmatpush1.bf16.msra.mxu0 0
        %436 = vmatprep.subr.bf16.mxu0 0
        %437 = vmatpush1.bf16.msra.mxu0 0
        %438 = vmatprep.subr.bf16.mxu0 0
        %439 = vmatpush1.bf16.msra.mxu0 0
        %440 = vmatprep.mubr.bf16.mxu0 0
        %441 = vmatmul.mubr.bf16.gmra.mrb[0].mxu0 %v406
        %v442 = vpop.f32.mrb[0].mxu0
        %v443 = vadd.f32 0.0, %v442
        %v444 = vpop.f32.mrb[0].mxu0
        %v445 = vpop.f32.mrb[0].mxu0
        %v446 = vpop.f32.mrb[0].mxu0
        %447 = vdwg.mxu0
        %449 = vrot.lane.b32.xlu0 %v443, 120
        %v450 = vpop.permute.xlu0 %449
        %452 = vrot.lane.b32.xlu0 %v443, 112
        %v453 = vpop.permute.xlu0 %452
        %455 = vrot.lane.b32.xlu0 %v443, 104
        %v456 = vpop.permute.xlu0 %455
        %v458 = vpack.c.bf16 %v443, %v443
        %v459 = vpack.c.bf16 %v450, %v450
        %v460 = vpack.c.bf16 %v453, %v453
        %v461 = vpack.c.bf16 %v456, %v456
        %463 = vrot.lane.b32.xlu0 %v458, 96
        %v464 = vpop.permute.xlu0 %463
        %vm465 = vcmask 64512
        %v467 = vsel %vm465, %v458, 0
        %v470 = vsel %vm465, %v464, 0
        %472 = vmatprep.subr.bf16.mxu0 0
        %473 = vmatpush1.bf16.xpose.msra.mxu0 %v470
        %474 = vmatprep.subr.bf16.mxu0 0
        %475 = vmatpush1.bf16.xpose.msra.mxu0 0
        %476 = vmatprep.subr.bf16.mxu0 0
        %477 = vmatpush1.bf16.xpose.msra.mxu0 0
        %478 = vmatprep.subr.bf16.mxu0 0
        %479 = vmatpush1.bf16.xpose.msra.mxu0 0
        %480 = vmatprep.subr.bf16.mxu0 0
        %481 = vmatpush1.bf16.xpose.msra.mxu0 0
        %482 = vmatprep.subr.bf16.mxu0 0
        %483 = vmatpush1.bf16.xpose.msra.mxu0 0
        %484 = vmatprep.subr.bf16.mxu0 0
        %485 = vmatpush1.bf16.xpose.msra.mxu0 0
        %486 = vmatprep.subr.bf16.mxu0 0
        %487 = vmatpush1.bf16.xpose.msra.mxu0 0
        %488 = vmatprep.subr.bf16.mxu0 0
        %489 = vmatpush1.bf16.xpose.msra.mxu0 0
        %490 = vmatprep.subr.bf16.mxu0 0
        %491 = vmatpush1.bf16.xpose.msra.mxu0 0
        %492 = vmatprep.subr.bf16.mxu0 0
        %493 = vmatpush1.bf16.xpose.msra.mxu0 0
        %494 = vmatprep.subr.bf16.mxu0 0
        %495 = vmatpush1.bf16.xpose.msra.mxu0 0
        %496 = vmatprep.subr.bf16.mxu0 0
        %497 = vmatpush1.bf16.xpose.msra.mxu0 0
        %498 = vmatprep.subr.bf16.mxu0 0
        %499 = vmatpush1.bf16.xpose.msra.mxu0 0
        %500 = vmatprep.subr.bf16.mxu0 0
        %501 = vmatpush1.bf16.xpose.msra.mxu0 0
        %502 = vmatprep.subr.bf16.mxu0 0
        %503 = vmatpush1.bf16.xpose.msra.mxu0 0
        %504 = vmatprep.mubr.bf16.mxu0 0
        %505 = vmatmul.mubr.bf16.gmra.mrb[0].mxu0 %v467
        %v506 = vpop.f32.mrb[0].mxu0
        %v507 = vadd.f32 0.0, %v506
        %v508 = vpop.f32.mrb[0].mxu0
        %v509 = vpop.f32.mrb[0].mxu0
        %v510 = vpop.f32.mrb[0].mxu0
        %511 = vdwg.mxu0
        %513 = vrot.lane.b32.xlu0 %v459, 96
        %v514 = vpop.permute.xlu0 %513
        %v516 = vsel %vm465, %v459, 0
        %v519 = vsel %vm465, %v514, 0
        %521 = vmatprep.subr.bf16.mxu0 0
        %522 = vmatpush1.bf16.xpose.msra.mxu0 %v519
        %523 = vmatprep.subr.bf16.mxu0 0
        %524 = vmatpush1.bf16.xpose.msra.mxu0 0
        %525 = vmatprep.subr.bf16.mxu0 0
        %526 = vmatpush1.bf16.xpose.msra.mxu0 0
        %527 = vmatprep.subr.bf16.mxu0 0
        %528 = vmatpush1.bf16.xpose.msra.mxu0 0
        %529 = vmatprep.subr.bf16.mxu0 0
        %530 = vmatpush1.bf16.xpose.msra.mxu0 0
        %531 = vmatprep.subr.bf16.mxu0 0
        %532 = vmatpush1.bf16.xpose.msra.mxu0 0
        %533 = vmatprep.subr.bf16.mxu0 0
        %534 = vmatpush1.bf16.xpose.msra.mxu0 0
        %535 = vmatprep.subr.bf16.mxu0 0
        %536 = vmatpush1.bf16.xpose.msra.mxu0 0
        %537 = vmatprep.subr.bf16.mxu0 0
        %538 = vmatpush1.bf16.xpose.msra.mxu0 0
        %539 = vmatprep.subr.bf16.mxu0 0
        %540 = vmatpush1.bf16.xpose.msra.mxu0 0
        %541 = vmatprep.subr.bf16.mxu0 0
        %542 = vmatpush1.bf16.xpose.msra.mxu0 0
        %543 = vmatprep.subr.bf16.mxu0 0
        %544 = vmatpush1.bf16.xpose.msra.mxu0 0
        %545 = vmatprep.subr.bf16.mxu0 0
        %546 = vmatpush1.bf16.xpose.msra.mxu0 0
        %547 = vmatprep.subr.bf16.mxu0 0
        %548 = vmatpush1.bf16.xpose.msra.mxu0 0
        %549 = vmatprep.subr.bf16.mxu0 0
        %550 = vmatpush1.bf16.xpose.msra.mxu0 0
        %551 = vmatprep.subr.bf16.mxu0 0
        %552 = vmatpush1.bf16.xpose.msra.mxu0 0
        %553 = vmatprep.mubr.bf16.mxu0 0
        %554 = vmatmul.mubr.bf16.gmra.mrb[0].mxu0 %v516
        %v555 = vpop.f32.mrb[0].mxu0
        %v556 = vadd.f32 0.0, %v555
        %v557 = vpop.f32.mrb[0].mxu0
        %v558 = vpop.f32.mrb[0].mxu0
        %v559 = vpop.f32.mrb[0].mxu0
        %560 = vdwg.mxu0
        %562 = vrot.lane.b32.xlu0 %v460, 96
        %v563 = vpop.permute.xlu0 %562
        %v565 = vsel %vm465, %v460, 0
        %v568 = vsel %vm465, %v563, 0
        %570 = vmatprep.subr.bf16.mxu0 0
        %571 = vmatpush1.bf16.xpose.msra.mxu0 %v568
        %572 = vmatprep.subr.bf16.mxu0 0
        %573 = vmatpush1.bf16.xpose.msra.mxu0 0
        %574 = vmatprep.subr.bf16.mxu0 0
        %575 = vmatpush1.bf16.xpose.msra.mxu0 0
        %576 = vmatprep.subr.bf16.mxu0 0
        %577 = vmatpush1.bf16.xpose.msra.mxu0 0
        %578 = vmatprep.subr.bf16.mxu0 0
        %579 = vmatpush1.bf16.xpose.msra.mxu0 0
        %580 = vmatprep.subr.bf16.mxu0 0
        %581 = vmatpush1.bf16.xpose.msra.mxu0 0
        %582 = vmatprep.subr.bf16.mxu0 0
        %583 = vmatpush1.bf16.xpose.msra.mxu0 0
        %584 = vmatprep.subr.bf16.mxu0 0
        %585 = vmatpush1.bf16.xpose.msra.mxu0 0
        %586 = vmatprep.subr.bf16.mxu0 0
        %587 = vmatpush1.bf16.xpose.msra.mxu0 0
        %588 = vmatprep.subr.bf16.mxu0 0
        %589 = vmatpush1.bf16.xpose.msra.mxu0 0
        %590 = vmatprep.subr.bf16.mxu0 0
        %591 = vmatpush1.bf16.xpose.msra.mxu0 0
        %592 = vmatprep.subr.bf16.mxu0 0
        %593 = vmatpush1.bf16.xpose.msra.mxu0 0
        %594 = vmatprep.subr.bf16.mxu0 0
        %595 = vmatpush1.bf16.xpose.msra.mxu0 0
        %596 = vmatprep.subr.bf16.mxu0 0
        %597 = vmatpush1.bf16.xpose.msra.mxu0 0
        %598 = vmatprep.subr.bf16.mxu0 0
        %599 = vmatpush1.bf16.xpose.msra.mxu0 0
        %600 = vmatprep.subr.bf16.mxu0 0
        %601 = vmatpush1.bf16.xpose.msra.mxu0 0
        %602 = vmatprep.mubr.bf16.mxu0 0
        %603 = vmatmul.mubr.bf16.gmra.mrb[0].mxu0 %v565
        %v604 = vpop.f32.mrb[0].mxu0
        %v605 = vadd.f32 0.0, %v604
        %v606 = vpop.f32.mrb[0].mxu0
        %v607 = vpop.f32.mrb[0].mxu0
        %v608 = vpop.f32.mrb[0].mxu0
        %609 = vdwg.mxu0
        %611 = vrot.lane.b32.xlu0 %v461, 96
        %v612 = vpop.permute.xlu0 %611
        %v614 = vsel %vm465, %v461, 0
        %v617 = vsel %vm465, %v612, 0
        %619 = vmatprep.subr.bf16.mxu0 0
        %620 = vmatpush1.bf16.xpose.msra.mxu0 %v617
        %621 = vmatprep.subr.bf16.mxu0 0
        %622 = vmatpush1.bf16.xpose.msra.mxu0 0
        %623 = vmatprep.subr.bf16.mxu0 0
        %624 = vmatpush1.bf16.xpose.msra.mxu0 0
        %625 = vmatprep.subr.bf16.mxu0 0
        %626 = vmatpush1.bf16.xpose.msra.mxu0 0
        %627 = vmatprep.subr.bf16.mxu0 0
        %628 = vmatpush1.bf16.xpose.msra.mxu0 0
        %629 = vmatprep.subr.bf16.mxu0 0
        %630 = vmatpush1.bf16.xpose.msra.mxu0 0
        %631 = vmatprep.subr.bf16.mxu0 0
        %632 = vmatpush1.bf16.xpose.msra.mxu0 0
        %633 = vmatprep.subr.bf16.mxu0 0
        %634 = vmatpush1.bf16.xpose.msra.mxu0 0
        %635 = vmatprep.subr.bf16.mxu0 0
        %636 = vmatpush1.bf16.xpose.msra.mxu0 0
        %637 = vmatprep.subr.bf16.mxu0 0
        %638 = vmatpush1.bf16.xpose.msra.mxu0 0
        %639 = vmatprep.subr.bf16.mxu0 0
        %640 = vmatpush1.bf16.xpose.msra.mxu0 0
        %641 = vmatprep.subr.bf16.mxu0 0
        %642 = vmatpush1.bf16.xpose.msra.mxu0 0
        %643 = vmatprep.subr.bf16.mxu0 0
        %644 = vmatpush1.bf16.xpose.msra.mxu0 0
        %645 = vmatprep.subr.bf16.mxu0 0
        %646 = vmatpush1.bf16.xpose.msra.mxu0 0
        %647 = vmatprep.subr.bf16.mxu0 0
        %648 = vmatpush1.bf16.xpose.msra.mxu0 0
        %649 = vmatprep.subr.bf16.mxu0 0
        %650 = vmatpush1.bf16.xpose.msra.mxu0 0
        %651 = vmatprep.mubr.bf16.mxu0 0
        %652 = vmatmul.mubr.bf16.gmra.mrb[0].mxu0 %v614
        %v653 = vpop.f32.mrb[0].mxu0
        %v654 = vadd.f32 0.0, %v653
        %v655 = vpop.f32.mrb[0].mxu0
        %v656 = vpop.f32.mrb[0].mxu0
        %v657 = vpop.f32.mrb[0].mxu0
        %658 = vdwg.mxu0
        %v659 = vsel %vm465, %v507, -inf
        %660 = vmax.xlane.f32.xlu0 %v659
        %v661 = vpop.xlane.xlu0 %660
        %v662 = vsel %vm465, %v556, -inf
        %663 = vmax.xlane.f32.xlu0 %v662
        %v664 = vpop.xlane.xlu0 %663
        %v665 = vsel %vm465, %v605, -inf
        %666 = vmax.xlane.f32.xlu0 %v665
        %v667 = vpop.xlane.xlu0 %666
        %v668 = vsel %vm465, %v654, -inf
        %669 = vmax.xlane.f32.xlu0 %v668
        %v670 = vpop.xlane.xlu0 %669
        %v671 = vsub.f32 %v507, %v661
        %v672 = vsub.f32 %v556, %v664
        %v673 = vsub.f32 %v605, %v667
        %v674 = vsub.f32 %v654, %v670
        %v675 = vmul.f32 %v671, 1.442695
        %v676 = vpow.pop %v675
        %v677 = vmul.f32 %v672, 1.442695
        %v678 = vpow.pop %v677
        %v679 = vmul.f32 %v673, 1.442695
        %v680 = vpow.pop %v679
        %v681 = vmul.f32 %v674, 1.442695
        %v682 = vpow.pop %v681
        %v683 = vsel %vm465, %v676, 0.0
        %684 = vadd.xlane.f32.xlu0 %v683
        %v685 = vpop.xlane.xlu0 %684
        %v686 = vsel %vm465, %v678, 0.0
        %687 = vadd.xlane.f32.xlu0 %v686
        %v688 = vpop.xlane.xlu0 %687
        %v689 = vsel %vm465, %v680, 0.0
        %690 = vadd.xlane.f32.xlu0 %v689
        %v691 = vpop.xlane.xlu0 %690
        %v692 = vsel %vm465, %v682, 0.0
        %693 = vadd.xlane.f32.xlu0 %v692
        %v694 = vpop.xlane.xlu0 %693
        %v695 = vrcp.pop %v685
        %v696 = vrcp.pop %v688
        %v697 = vrcp.pop %v691
        %v698 = vrcp.pop %v694
        %v699 = vmul.f32 %v676, %v695
        %v700 = vmul.f32 %v678, %v696
        %v701 = vmul.f32 %v680, %v697
        %v702 = vmul.f32 %v682, %v698
        %v703 = vpack.c.bf16 %v699, %v699
        %v704 = vpack.c.bf16 %v700, %v700
        %v705 = vpack.c.bf16 %v701, %v701
        %v706 = vpack.c.bf16 %v702, %v702
        %707 = vrot.lane.b32.xlu0 %v458, 64
        %v708 = vpop.permute.xlu0 %707
        %v710 = vsel %vm465, %v703, 0
        %vm712 = vcmask 1043456
        %v714 = vsel %vm712, %v708, 0
        %716 = vmatprep.subr.bf16.mxu0 0
        %717 = vmatpush1.bf16.msra.mxu0 %v714
        %718 = vmatprep.subr.bf16.mxu0 0
        %719 = vmatpush1.bf16.msra.mxu0 0
        %720 = vmatprep.subr.bf16.mxu0 0
        %721 = vmatpush1.bf16.msra.mxu0 0
        %722 = vmatprep.subr.bf16.mxu0 0
        %723 = vmatpush1.bf16.msra.mxu0 0
        %724 = vmatprep.subr.bf16.mxu0 0
        %725 = vmatpush1.bf16.msra.mxu0 0
        %726 = vmatprep.subr.bf16.mxu0 0
        %727 = vmatpush1.bf16.msra.mxu0 0
        %728 = vmatprep.subr.bf16.mxu0 0
        %729 = vmatpush1.bf16.msra.mxu0 0
        %730 = vmatprep.subr.bf16.mxu0 0
        %731 = vmatpush1.bf16.msra.mxu0 0
        %732 = vmatprep.subr.bf16.mxu0 0
        %733 = vmatpush1.bf16.msra.mxu0 0
        %734 = vmatprep.subr.bf16.mxu0 0
        %735 = vmatpush1.bf16.msra.mxu0 0
        %736 = vmatprep.subr.bf16.mxu0 0
        %737 = vmatpush1.bf16.msra.mxu0 0
        %738 = vmatprep.subr.bf16.mxu0 0
        %739 = vmatpush1.bf16.msra.mxu0 0
        %740 = vmatprep.subr.bf16.mxu0 0
        %741 = vmatpush1.bf16.msra.mxu0 0
        %742 = vmatprep.subr.bf16.mxu0 0
        %743 = vmatpush1.bf16.msra.mxu0 0
        %744 = vmatprep.subr.bf16.mxu0 0
        %745 = vmatpush1.bf16.msra.mxu0 0
        %746 = vmatprep.subr.bf16.mxu0 0
        %747 = vmatpush1.bf16.msra.mxu0 0
        %748 = vmatprep.mubr.bf16.mxu0 0
        %749 = vmatmul.mubr.bf16.gmra.mrb[0].mxu0 %v710
        %v750 = vpop.f32.mrb[0].mxu0
        %v751 = vadd.f32 0.0, %v750
        %v752 = vpop.f32.mrb[0].mxu0
        %v753 = vpop.f32.mrb[0].mxu0
        %v754 = vpop.f32.mrb[0].mxu0
        %755 = vdwg.mxu0
        %756 = vrot.lane.b32.xlu0 %v459, 64
        %v757 = vpop.permute.xlu0 %756
        %v759 = vsel %vm465, %v704, 0
        %v762 = vsel %vm712, %v757, 0
        %764 = vmatprep.subr.bf16.mxu0 0
        %765 = vmatpush1.bf16.msra.mxu0 %v762
        %766 = vmatprep.subr.bf16.mxu0 0
        %767 = vmatpush1.bf16.msra.mxu0 0
        %768 = vmatprep.subr.bf16.mxu0 0
        %769 = vmatpush1.bf16.msra.mxu0 0
        %770 = vmatprep.subr.bf16.mxu0 0
        %771 = vmatpush1.bf16.msra.mxu0 0
        %772 = vmatprep.subr.bf16.mxu0 0
        %773 = vmatpush1.bf16.msra.mxu0 0
        %774 = vmatprep.subr.bf16.mxu0 0
        %775 = vmatpush1.bf16.msra.mxu0 0
        %776 = vmatprep.subr.bf16.mxu0 0
        %777 = vmatpush1.bf16.msra.mxu0 0
        %778 = vmatprep.subr.bf16.mxu0 0
        %779 = vmatpush1.bf16.msra.mxu0 0
        %780 = vmatprep.subr.bf16.mxu0 0
        %781 = vmatpush1.bf16.msra.mxu0 0
        %782 = vmatprep.subr.bf16.mxu0 0
        %783 = vmatpush1.bf16.msra.mxu0 0
        %784 = vmatprep.subr.bf16.mxu0 0
        %785 = vmatpush1.bf16.msra.mxu0 0
        %786 = vmatprep.subr.bf16.mxu0 0
        %787 = vmatpush1.bf16.msra.mxu0 0
        %788 = vmatprep.subr.bf16.mxu0 0
        %789 = vmatpush1.bf16.msra.mxu0 0
        %790 = vmatprep.subr.bf16.mxu0 0
        %791 = vmatpush1.bf16.msra.mxu0 0
        %792 = vmatprep.subr.bf16.mxu0 0
        %793 = vmatpush1.bf16.msra.mxu0 0
        %794 = vmatprep.subr.bf16.mxu0 0
        %795 = vmatpush1.bf16.msra.mxu0 0
        %796 = vmatprep.mubr.bf16.mxu0 0
        %797 = vmatmul.mubr.bf16.gmra.mrb[0].mxu0 %v759
        %v798 = vpop.f32.mrb[0].mxu0
        %v799 = vadd.f32 0.0, %v798
        %v800 = vpop.f32.mrb[0].mxu0
        %v801 = vpop.f32.mrb[0].mxu0
        %v802 = vpop.f32.mrb[0].mxu0
        %803 = vdwg.mxu0
        %804 = vrot.lane.b32.xlu0 %v460, 64
        %v805 = vpop.permute.xlu0 %804
        %v807 = vsel %vm465, %v705, 0
        %v810 = vsel %vm712, %v805, 0
        %812 = vmatprep.subr.bf16.mxu0 0
        %813 = vmatpush1.bf16.msra.mxu0 %v810
        %814 = vmatprep.subr.bf16.mxu0 0
        %815 = vmatpush1.bf16.msra.mxu0 0
        %816 = vmatprep.subr.bf16.mxu0 0
        %817 = vmatpush1.bf16.msra.mxu0 0
        %818 = vmatprep.subr.bf16.mxu0 0
        %819 = vmatpush1.bf16.msra.mxu0 0
        %820 = vmatprep.subr.bf16.mxu0 0
        %821 = vmatpush1.bf16.msra.mxu0 0
        %822 = vmatprep.subr.bf16.mxu0 0
        %823 = vmatpush1.bf16.msra.mxu0 0
        %824 = vmatprep.subr.bf16.mxu0 0
        %825 = vmatpush1.bf16.msra.mxu0 0
        %826 = vmatprep.subr.bf16.mxu0 0
        %827 = vmatpush1.bf16.msra.mxu0 0
        %828 = vmatprep.subr.bf16.mxu0 0
        %829 = vmatpush1.bf16.msra.mxu0 0
        %830 = vmatprep.subr.bf16.mxu0 0
        %831 = vmatpush1.bf16.msra.mxu0 0
        %832 = vmatprep.subr.bf16.mxu0 0
        %833 = vmatpush1.bf16.msra.mxu0 0
        %834 = vmatprep.subr.bf16.mxu0 0
        %835 = vmatpush1.bf16.msra.mxu0 0
        %836 = vmatprep.subr.bf16.mxu0 0
        %837 = vmatpush1.bf16.msra.mxu0 0
        %838 = vmatprep.subr.bf16.mxu0 0
        %839 = vmatpush1.bf16.msra.mxu0 0
        %840 = vmatprep.subr.bf16.mxu0 0
        %841 = vmatpush1.bf16.msra.mxu0 0
        %842 = vmatprep.subr.bf16.mxu0 0
        %843 = vmatpush1.bf16.msra.mxu0 0
        %844 = vmatprep.mubr.bf16.mxu0 0
        %845 = vmatmul.mubr.bf16.gmra.mrb[0].mxu0 %v807
        %v846 = vpop.f32.mrb[0].mxu0
        %v847 = vadd.f32 0.0, %v846
        %v848 = vpop.f32.mrb[0].mxu0
        %v849 = vpop.f32.mrb[0].mxu0
        %v850 = vpop.f32.mrb[0].mxu0
        %851 = vdwg.mxu0
        %852 = vrot.lane.b32.xlu0 %v461, 64
        %v853 = vpop.permute.xlu0 %852
        %v855 = vsel %vm465, %v706, 0
        %v858 = vsel %vm712, %v853, 0
        %860 = vmatprep.subr.bf16.mxu0 0
        %861 = vmatpush1.bf16.msra.mxu0 %v858
        %862 = vmatprep.subr.bf16.mxu0 0
        %863 = vmatpush1.bf16.msra.mxu0 0
        %864 = vmatprep.subr.bf16.mxu0 0
        %865 = vmatpush1.bf16.msra.mxu0 0
        %866 = vmatprep.subr.bf16.mxu0 0
        %867 = vmatpush1.bf16.msra.mxu0 0
        %868 = vmatprep.subr.bf16.mxu0 0
        %869 = vmatpush1.bf16.msra.mxu0 0
        %870 = vmatprep.subr.bf16.mxu0 0
        %871 = vmatpush1.bf16.msra.mxu0 0
        %872 = vmatprep.subr.bf16.mxu0 0
        %873 = vmatpush1.bf16.msra.mxu0 0
        %874 = vmatprep.subr.bf16.mxu0 0
        %875 = vmatpush1.bf16.msra.mxu0 0
        %876 = vmatprep.subr.bf16.mxu0 0
        %877 = vmatpush1.bf16.msra.mxu0 0
        %878 = vmatprep.subr.bf16.mxu0 0
        %879 = vmatpush1.bf16.msra.mxu0 0
        %880 = vmatprep.subr.bf16.mxu0 0
        %881 = vmatpush1.bf16.msra.mxu0 0
        %882 = vmatprep.subr.bf16.mxu0 0
        %883 = vmatpush1.bf16.msra.mxu0 0
        %884 = vmatprep.subr.bf16.mxu0 0
        %885 = vmatpush1.bf16.msra.mxu0 0
        %886 = vmatprep.subr.bf16.mxu0 0
        %887 = vmatpush1.bf16.msra.mxu0 0
        %888 = vmatprep.subr.bf16.mxu0 0
        %889 = vmatpush1.bf16.msra.mxu0 0
        %890 = vmatprep.subr.bf16.mxu0 0
        %891 = vmatpush1.bf16.msra.mxu0 0
        %892 = vmatprep.mubr.bf16.mxu0 0
        %893 = vmatmul.mubr.bf16.gmra.mrb[0].mxu0 %v855
        %v894 = vpop.f32.mrb[0].mxu0
        %v895 = vadd.f32 0.0, %v894
        %v896 = vpop.f32.mrb[0].mxu0
        %v897 = vpop.f32.mrb[0].mxu0
        %v898 = vpop.f32.mrb[0].mxu0
        %899 = vdwg.mxu0
        %901 = vrot.lane.b32.xlu0 %v799, 8
        %v902 = vpop.permute.xlu0 %901
        %905 = vrot.lane.b32.xlu0 %v847, 16
        %v906 = vpop.permute.xlu0 %905
        %909 = vrot.lane.b32.xlu0 %v895, 24
        %v910 = vpop.permute.xlu0 %909
        %v912 = vsel %vm465, %v751, %v902
        %vm913 = vcmask 130048
        %v914 = vsel %vm913, %v912, %v906
        %vm915 = vcmask 195584
        %v916 = vsel %vm915, %v914, %v910
        %v917 = vadd.f32 %v916, %v356
        %v918 = vld [vmem:[%s4] sm:$0x1]
        %v919 = vld [vmem:[%s5] sm:$0x1]
        %v920 = vsel %vm359, %v917, 0.0
        %921 = vadd.xlane.f32.xlu0 %v920
        %v922 = vpop.xlane.xlu0 %921
        %v923 = vmul.f32 %v922, %v363
        %v924 = vsub.f32 %v917, %v923
        %v925 = vmul.f32 %v924, %v924
        %v926 = vsel %vm359, %v925, 0.0
        %927 = vadd.xlane.f32.xlu0 %v926
        %v928 = vpop.xlane.xlu0 %927
        %v929 = vmul.f32 %v928, %v363
        %v930 = vadd.f32 %v929, 1e-05
        %v931 = vrsqrt.pop %v930
        %v932 = vmul.f32 %v924, %v931
        %v934 = vlaneseq
        %v935 = vshrl.u32 %v934, 7
        %v936 = vsub.s32 0, %v935
        %v937 = vrot.slane %v918, %v936
        %v939 = vmul.f32 %v932, %v937
        %v941 = vlaneseq
        %v942 = vshrl.u32 %v941, 7
        %v943 = vsub.s32 0, %v942
        %v944 = vrot.slane %v919, %v943
        %v946 = vadd.f32 %v939, %v944
        %v947 = vpack.c.bf16 %v946, %v946
        %v948 = vld [vmem:[%s6] sm:$0xf]
        %v949 = vld [vmem:[%s6 + $0x4] sm:$0xf]
        %v950 = vld [vmem:[%s6 + $0x8] sm:$0xf]
        %v951 = vld [vmem:[%s6 + $0xc] sm:$0xf]
        %v952 = vld [vmem:[%s7] sm:$0x1]
        %v954 = vlaneseq
        %v955 = vshrl.u32 %v954, 7
        %v956 = vsub.s32 0, %v955
        %v957 = vrot.slane %v952, %v956
        %v963 = vunpack.c.l.b16 %v948
        %v964 = vunpack.c.l.b16 %v949
        %v965 = vunpack.c.l.b16 %v950
        %v966 = vunpack.c.l.b16 %v951
        %v967 = vpack.c.b16 %v964, %v963
        %v968 = vpack.c.b16 %v966, %v965
        %v972 = vsel %vm359, %v947, 0
        %974 = vmatprep.subr.bf16.mxu0 0
        %975 = vmatpush1.bf16.msra.mxu0 %v967
        %976 = vmatprep.subr.bf16.mxu0 0
        %977 = vmatpush1.bf16.msra.mxu0 %v968
        %978 = vmatprep.subr.bf16.mxu0 0
        %979 = vmatpush1.bf16.msra.mxu0 0
        %980 = vmatprep.subr.bf16.mxu0 0
        %981 = vmatpush1.bf16.msra.mxu0 0
        %982 = vmatprep.subr.bf16.mxu0 0
        %983 = vmatpush1.bf16.msra.mxu0 0
        %984 = vmatprep.subr.bf16.mxu0 0
        %985 = vmatpush1.bf16.msra.mxu0 0
        %986 = vmatprep.subr.bf16.mxu0 0
        %987 = vmatpush1.bf16.msra.mxu0 0
        %988 = vmatprep.subr.bf16.mxu0 0
        %989 = vmatpush1.bf16.msra.mxu0 0
        %990 = vmatprep.subr.bf16.mxu0 0
        %991 = vmatpush1.bf16.msra.mxu0 0
        %992 = vmatprep.subr.bf16.mxu0 0
        %993 = vmatpush1.bf16.msra.mxu0 0
        %994 = vmatprep.subr.bf16.mxu0 0
        %995 = vmatpush1.bf16.msra.mxu0 0
        %996 = vmatprep.subr.bf16.mxu0 0
        %997 = vmatpush1.bf16.msra.mxu0 0
        %998 = vmatprep.subr.bf16.mxu0 0
        %999 = vmatpush1.bf16.msra.mxu0 0
        %1000 = vmatprep.subr.bf16.mxu0 0
        %1001 = vmatpush1.bf16.msra.mxu0 0
        %1002 = vmatprep.subr.bf16.mxu0 0
        %1003 = vmatpush1.bf16.msra.mxu0 0
        %1004 = vmatprep.subr.bf16.mxu0 0
        %1005 = vmatpush1.bf16.msra.mxu0 0
        %1006 = vmatprep.mubr.bf16.mxu0 0
        %1007 = vmatmul.mubr.bf16.gmra.mrb[0].mxu0 %v972
        %v1008 = vpop.f32.mrb[0].mxu0
        %v1009 = vadd.f32 %v957, %v1008
        %v1010 = vpop.f32.mrb[0].mxu0
        %v1011 = vpop.f32.mrb[0].mxu0
        %v1012 = vpop.f32.mrb[0].mxu0
        %1013 = vdwg.mxu0
        %v1014 = vmul.f32 %v1009, 0.5
        %v1015 = vmul.f32 %v1009, 0.70710677
        %v1016 = verf.f32.pop %v1015
        %v1017 = vadd.f32 %v1016, 1.0
        %v1018 = vmul.f32 %v1014, %v1017
        %v1019 = vpack.c.bf16 %v1018, %v1018
        %v1020 = vld [vmem:[%s8] sm:$0xf]
        %v1021 = vld [vmem:[%s8 + $0x4] sm:$0xf]
        %v1022 = vld [vmem:[%s8 + $0x8] sm:$0xf]
        %v1023 = vld [vmem:[%s8 + $0xc] sm:$0xf]
        %v1024 = vld [vmem:[%s8 + $0x10] sm:$0xf]
        %v1025 = vld [vmem:[%s8 + $0x14] sm:$0xf]
        %v1026 = vld [vmem:[%s8 + $0x18] sm:$0xf]
        %v1027 = vld [vmem:[%s8 + $0x1c] sm:$0xf]
        %v1028 = vld [vmem:[%s8 + $0x20] sm:$0xf]
        %v1029 = vld [vmem:[%s8 + $0x24] sm:$0xf]
        %v1030 = vld [vmem:[%s8 + $0x28] sm:$0xf]
        %v1031 = vld [vmem:[%s8 + $0x2c] sm:$0xf]
        %v1032 = vld [vmem:[%s8 + $0x30] sm:$0xf]
        %v1033 = vld [vmem:[%s8 + $0x34] sm:$0xf]
        %v1034 = vld [vmem:[%s8 + $0x38] sm:$0xf]
        %v1035 = vld [vmem:[%s8 + $0x3c] sm:$0xf]
        %v1036 = vld [vmem:[%s9] sm:$0x1]
        %v1038 = vlaneseq
        %v1039 = vshrl.u32 %v1038, 7
        %v1040 = vsub.s32 0, %v1039
        %v1041 = vrot.slane %v1036, %v1040
        %v1059 = vunpack.c.l.b16 %v1020
        %v1060 = vunpack.c.l.b16 %v1021
        %v1061 = vunpack.c.l.b16 %v1022
        %v1062 = vunpack.c.l.b16 %v1023
        %v1063 = vunpack.c.l.b16 %v1024
        %v1064 = vunpack.c.l.b16 %v1025
        %v1065 = vunpack.c.l.b16 %v1026
        %v1066 = vunpack.c.l.b16 %v1027
        %v1067 = vunpack.c.l.b16 %v1028
        %v1068 = vunpack.c.l.b16 %v1029
        %v1069 = vunpack.c.l.b16 %v1030
        %v1070 = vunpack.c.l.b16 %v1031
        %v1071 = vunpack.c.l.b16 %v1032
        %v1072 = vunpack.c.l.b16 %v1033
        %v1073 = vunpack.c.l.b16 %v1034
        %v1074 = vunpack.c.l.b16 %v1035
        %v1075 = vpack.c.b16 %v1060, %v1059
        %v1076 = vpack.c.b16 %v1062, %v1061
        %v1077 = vpack.c.b16 %v1064, %v1063
        %v1078 = vpack.c.b16 %v1066, %v1065
        %v1079 = vpack.c.b16 %v1068, %v1067
        %v1080 = vpack.c.b16 %v1070, %v1069
        %v1081 = vpack.c.b16 %v1072, %v1071
        %v1082 = vpack.c.b16 %v1074, %v1073
        %1091 = vmatprep.subr.bf16.mxu0 0
        %1092 = vmatpush1.bf16.msra.mxu0 %v1075
        %1093 = vmatprep.subr.bf16.mxu0 0
        %1094 = vmatpush1.bf16.msra.mxu0 %v1076
        %1095 = vmatprep.subr.bf16.mxu0 0
        %1096 = vmatpush1.bf16.msra.mxu0 %v1077
        %1097 = vmatprep.subr.bf16.mxu0 0
        %1098 = vmatpush1.bf16.msra.mxu0 %v1078
        %1099 = vmatprep.subr.bf16.mxu0 0
        %1100 = vmatpush1.bf16.msra.mxu0 %v1079
        %1101 = vmatprep.subr.bf16.mxu0 0
        %1102 = vmatpush1.bf16.msra.mxu0 %v1080
        %1103 = vmatprep.subr.bf16.mxu0 0
        %1104 = vmatpush1.bf16.msra.mxu0 %v1081
        %1105 = vmatprep.subr.bf16.mxu0 0
        %1106 = vmatpush1.bf16.msra.mxu0 %v1082
        %1107 = vmatprep.subr.bf16.mxu0 0
        %1108 = vmatpush1.bf16.msra.mxu0 0
        %1109 = vmatprep.subr.bf16.mxu0 0
        %1110 = vmatpush1.bf16.msra.mxu0 0
        %1111 = vmatprep.subr.bf16.mxu0 0
        %1112 = vmatpush1.bf16.msra.mxu0 0
        %1113 = vmatprep.subr.bf16.mxu0 0
        %1114 = vmatpush1.bf16.msra.mxu0 0
        %1115 = vmatprep.subr.bf16.mxu0 0
        %1116 = vmatpush1.bf16.msra.mxu0 0
        %1117 = vmatprep.subr.bf16.mxu0 0
        %1118 = vmatpush1.bf16.msra.mxu0 0
        %1119 = vmatprep.subr.bf16.mxu0 0
        %1120 = vmatpush1.bf16.msra.mxu0 0
        %1121 = vmatprep.subr.bf16.mxu0 0
        %1122 = vmatpush1.bf16.msra.mxu0 0
        %1123 = vmatprep.mubr.bf16.mxu0 0
        %1124 = vmatmul.mubr.bf16.gmra.mrb[0].mxu0 %v1019
        %v1125 = vpop.f32.mrb[0].mxu0
        %v1126 = vadd.f32 %v1041, %v1125
        %v1127 = vpop.f32.mrb[0].mxu0
        %v1128 = vpop.f32.mrb[0].mxu0
        %v1129 = vpop.f32.mrb[0].mxu0
        %1130 = vdwg.mxu0
        %v1131 = vadd.f32 %v1126, %v917
        %1132 = vst.msk [vmem:[%s350] sm:$0xff] %vm359, %v1131
        %s1133 = sand.u32 %s247, 1
        %s1134 = scalar_lea.sflag [#allocation3], %s1133
        %s1135 = sand.u32 %s247, 1
        %s1136 = smul.addr %s1135, 8
        %s1137 = scalar_lea.vmem [#allocation2], %s1136
        // Predicated region
        $region61: #{tpu_custom_call.1} parent=59 // pred_check
          %p1138 = pneg %p257
        $region62: #{tpu_custom_call.1} parent=59 // pred_check_branch
          %1140 = sbr.rel (%p1138) target = $region64
        $region63: #{tpu_custom_call.1} parent=59 // pred_region
          %s1142 = ssub.s32 128, 128
          %1143 = vsyncadd %s1134, %s1142
          %s1144 = smul.addr %s24, 128
          %s1145 = scalar_lea.hbm %s10, %s1144
          %s1147 = sshll.u32 %s1137, 4
          %s1148 = int_to_ptr.vmem [resolvable:$true] %s1147
          %1150 = dma.vmem_to_hbm [thread:$0]  %s1148, 128, %s1145, %s1134
        $region64: #{tpu_custom_call.1} parent=59 // pred_fallthru
          _
      $region60: #{tpu_custom_call.1} parent=5 // pred_fallthru
        _
      %p1151 = scmp.le.s32.totalorder 2, %s19
      // Predicated region
      $region65: #{tpu_custom_call.1} parent=5 // pred_check
        %p1152 = pneg %p1151
      $region66: #{tpu_custom_call.1} parent=5 // pred_check_branch
        %1154 = sbr.rel (%p1152) target = $region68
      $region67: #{tpu_custom_call.1} parent=5 // pred_region
        %s1155 = ssub.s32 %s19, 2
        // Predicated region
        $region69: #{tpu_custom_call.1} parent=67 // pred_check
          %p1156 = pneg %p263
        $region70: #{tpu_custom_call.1} parent=67 // pred_check_branch
          %1158 = sbr.rel (%p1156) target = $region72
        $region71: #{tpu_custom_call.1} parent=67 // pred_region
          %s1159 = sand.u32 %s248, 1
          %s1160 = scalar_lea.sflag [#allocation3], %s1159
          %s1161 = sand.u32 %s248, 1
          %s1162 = smul.addr %s1161, 8
          %s1163 = scalar_lea.vmem [#allocation2], %s1162
          %1164 = dma.done %s1160, 128
        $region72: #{tpu_custom_call.1} parent=67 // pred_fallthru
          _
      $region68: #{tpu_custom_call.1} parent=5 // pred_fallthru
        _
    $region6: #{tpu_custom_call.1} parent=1 // loop_footer
      %s23 = sadd.s32 1, %s19
    $region7: #{tpu_custom_call.1} parent=1 // loop_footer_branch
      %18 = sbr.rel target = $region3
    $region8: #{tpu_custom_call.1} parent=1 // loop_exit
      _
    %1165 = vsyncpa [#allocation3], 1
    %s1166 = scalar_lea.sflag [#allocation3], 1
    %1167 = vsyncpa %s1166, 1

</llo_original>
